<compile_context>
chip_gen: v6e
topology: v6e:2x2x1
jax: 0.10.0
libtpu: 0.0.40
codegen_flags: <defaults>
</compile_context>

<pallas_src>
import jax
import jax.numpy as jnp
from jax.experimental import pallas as pl
from jax.experimental.pallas import tpu as pltpu


def vnet_kernel(xt_ref, w1_ref, b1_ref, w2_ref, b2_ref, w3_ref, b3_ref, o_ref):
    # xt_ref: [o_dim, TB] f32   transposed batch tile (lane-dense)
    # w1_ref: [h, o_dim]  bf16  fc1 weight, PyTorch layout, VMEM-resident
    # b1_ref: [h, 1]      f32   fc1 bias (column), resident
    # w2_ref: [h, h]      bf16  fc2 weight, resident
    # b2_ref: [h, 1]      f32   fc2 bias (column), resident
    # w3_ref: [8, h]      bf16  fc3 weight slab (row 0 real, rows 1..7 zero)
    # b3_ref: [1, 1]      f32   fc3 bias scalar (SMEM)
    # o_ref : [1, TB]     f32   lane-dense output row for this batch tile
    xt = xt_ref[...].astype(jnp.bfloat16)                       # in-kernel cast

    # fc1 + ReLU:  [h, o_dim] @ [o_dim, TB] -> [h, TB]
    h1 = jnp.dot(w1_ref[...], xt, preferred_element_type=jnp.float32)
    h1 = jnp.maximum(h1 + b1_ref[...], 0.0).astype(jnp.bfloat16)

    # fc2 + ReLU:  [h, h] @ [h, TB] -> [h, TB]
    h2 = jnp.dot(w2_ref[...], h1, preferred_element_type=jnp.float32)
    h2 = jnp.maximum(h2 + b2_ref[...], 0.0).astype(jnp.bfloat16)

    # fc3:  [8, h] @ [h, TB] -> [8, TB]; row 0 is the real value head.
    v = jnp.dot(w3_ref[...], h2, preferred_element_type=jnp.float32)
    o_ref[...] = v[0:1, :] + b3_ref[0, 0]


def _tile_plan(B, tb_max=2048):
    """Pick a batch tile TB (multiple of 128) and padded batch size.

    - TB <= tb_max keeps VMEM use far under the default scoped limit on all of
      v5e / v6e / v7x.
    - num_tiles >= 2 whenever B > 128 so both v7x TensorCores get work.
    - TB is sized from ceil(B / num_tiles) so padding never balloons.
    """
    ceil128 = lambda v: -(-v // 128) * 128
    b128 = ceil128(max(int(B), 1))
    num_tiles = max(1, -(-b128 // tb_max))
    if num_tiles == 1 and b128 > 128:
        num_tiles = 2
    tb = ceil128(-(-b128 // num_tiles))
    b_pad = tb * num_tiles
    return tb, num_tiles, b_pad


def vnet_forward(x, params, tb_max=2048):
    """x: [B, o_dim] float32. Params in PyTorch layout. Returns [B] float32."""
    w1, b1, w2, b2, w3, b3 = params          # w*: [out, in], b*: [out]
    B, o_dim = x.shape
    h = w1.shape[0]

    tb, num_tiles, b_pad = _tile_plan(B, tb_max)

    # Host-side glue: pad + transpose x once (f32; bf16 cast happens in-kernel).
    xt = jnp.pad(x, ((0, b_pad - B), (0, 0))).T                 # [o_dim, b_pad]

    w1b = w1.astype(jnp.bfloat16)                               # [h, o_dim]
    w2b = w2.astype(jnp.bfloat16)                               # [h, h]
    w3_slab = jnp.zeros((8, h), jnp.float32).at[0, :].set(w3[0, :])
    w3b = w3_slab.astype(jnp.bfloat16)                          # [8, h]
    b1c = b1.reshape(h, 1).astype(jnp.float32)                  # [h, 1]
    b2c = b2.reshape(h, 1).astype(jnp.float32)                  # [h, 1]
    b3s = b3.reshape(1, 1).astype(jnp.float32)                  # [1, 1] SMEM

    out = pl.pallas_call(
        vnet_kernel,
        out_shape=jax.ShapeDtypeStruct((1, b_pad), jnp.float32),
        grid=(num_tiles,),
        in_specs=[
            pl.BlockSpec((o_dim, tb), lambda i: (0, i)),        # x^T: batch-tiled
            pl.BlockSpec((h, o_dim), lambda i: (0, 0)),         # w1: resident
            pl.BlockSpec((h, 1), lambda i: (0, 0)),             # b1: resident
            pl.BlockSpec((h, h), lambda i: (0, 0)),             # w2: resident
            pl.BlockSpec((h, 1), lambda i: (0, 0)),             # b2: resident
            pl.BlockSpec((8, h), lambda i: (0, 0)),             # w3 slab: resident
            pl.BlockSpec(memory_space=pltpu.MemorySpace.SMEM),  # b3 scalar
        ],
        out_specs=pl.BlockSpec((1, tb), lambda i: (0, i)),      # lane-dense row
        compiler_params=pltpu.CompilerParams(
            dimension_semantics=("parallel",)),
    )(xt, w1b, b1c, w2b, b2c, w3b, b3s)

    # torch.squeeze(vval, dim=-1): drop batch padding, return [B].
    return out[0, :B]


def init_vnet_params(key, o_dim, h_size):
    """Deterministic synthetic init mimicking nn.Linear's uniform bounds.

    Returned in PyTorch storage layout: w* are [out, in], b* are [out]."""
    ks = jax.random.split(key, 6)

    def linear(kw, kb, fan_in, fan_out):
        bound = 1.0 / (fan_in ** 0.5)
        w = jax.random.uniform(kw, (fan_out, fan_in), jnp.float32, -bound, bound)
        b = jax.random.uniform(kb, (fan_out,), jnp.float32, -bound, bound)
        return w, b

    w1, b1 = linear(ks[0], ks[1], o_dim, h_size)   # [h, o_dim], [h]
    w2, b2 = linear(ks[2], ks[3], h_size, h_size)  # [h, h],     [h]
    w3, b3 = linear(ks[4], ks[5], h_size, 1)       # [1, h],     [1]
    return (w1, b1, w2, b2, w3, b3)


def vnet_reference(x, params):
    """Plain-JAX reference matching the PyTorch forward, with the same bf16
    quantization of MXU inputs that the kernel applies (f32 accumulation)."""
    w1, b1, w2, b2, w3, b3 = params
    q = lambda a: a.astype(jnp.bfloat16).astype(jnp.float32)
    h1 = jnp.maximum(q(x) @ q(w1).T + b1, 0.0)
    h2 = jnp.maximum(q(h1) @ q(w2).T + b2, 0.0)
    v = q(h2) @ q(w3).T + b3
    return jnp.squeeze(v, axis=-1)


if __name__ == "__main__":
    key = jax.random.PRNGKey(0)
    k_x, k_p = jax.random.split(key)

    # Small but grid-exercising shapes: B=300 -> 2 tiles of 256 (with padding).
    B, O_DIM, H_SIZE = 300, 16, 256
    x = jax.random.normal(k_x, (B, O_DIM), dtype=jnp.float32)
    params = init_vnet_params(k_p, O_DIM, H_SIZE)

    out = vnet_forward(x, params)
    out = jax.block_until_ready(out)

    ref = vnet_reference(x, params)
    assert out.shape == (B,), f"bad output shape {out.shape}"
    assert jnp.allclose(out, ref, atol=1e-2, rtol=1e-2), "mismatch vs reference"

    print("KERNEL_OK")
</pallas_src>

<mosaic_0001>
module attributes {stable_mosaic.version = 11 : i64} {
  func.func @vnet_kernel(%arg0: i32, %arg1: memref<16x256xf32, #tpu.memory_space<vmem>>, %arg2: memref<256x16xbf16, #tpu.memory_space<vmem>>, %arg3: memref<256x1xf32, #tpu.memory_space<vmem>>, %arg4: memref<256x256xbf16, #tpu.memory_space<vmem>>, %arg5: memref<256x1xf32, #tpu.memory_space<vmem>>, %arg6: memref<8x256xbf16, #tpu.memory_space<vmem>>, %arg7: memref<1x1xf32, #tpu.memory_space<smem>>, %arg8: memref<1x256xf32, #tpu.memory_space<vmem>>) attributes {dimension_semantics = [#tpu.dimension_semantics<parallel>], iteration_bounds = array<i64: 2>, scalar_prefetch = 0 : i64, scratch_operands = 0 : i64, tpu.core_type = #tpu.core_type<tc>, window_params = [{transform_indices = @transform_0, window_bounds = array<i64: 16, 256>}, {pipeline_mode = #tpu.pipeline_mode<synchronous>, transform_indices = @transform_1, window_bounds = array<i64: 256, 16>}, {pipeline_mode = #tpu.pipeline_mode<synchronous>, transform_indices = @transform_2, window_bounds = array<i64: 256, 1>}, {pipeline_mode = #tpu.pipeline_mode<synchronous>, transform_indices = @transform_3, window_bounds = array<i64: 256, 256>}, {pipeline_mode = #tpu.pipeline_mode<synchronous>, transform_indices = @transform_4, window_bounds = array<i64: 256, 1>}, {pipeline_mode = #tpu.pipeline_mode<synchronous>, transform_indices = @transform_5, window_bounds = array<i64: 8, 256>}, {transform_indices = @transform_6, window_bounds = array<i64: 1, 1>}, {transform_indices = @transform_7, window_bounds = array<i64: 1, 256>}]} {
    %c0 = arith.constant 0 : index
    %c0_0 = arith.constant 0 : index
    %0 = vector.load %arg1[%c0, %c0_0] : memref<16x256xf32, #tpu.memory_space<vmem>>, vector<16x256xf32>
    %1 = arith.truncf %0 : vector<16x256xf32> to vector<16x256xbf16>
    %c0_1 = arith.constant 0 : index
    %c0_2 = arith.constant 0 : index
    %2 = vector.load %arg2[%c0_1, %c0_2] : memref<256x16xbf16, #tpu.memory_space<vmem>>, vector<256x16xbf16>
    %cst = arith.constant dense<0.000000e+00> : vector<256x256xf32>
    %3 = tpu.matmul %2, %1, %cst {dimension_numbers = #tpu.dot_dimension_numbers<[1], [0], [0], [1], [0, 0, 1, 1], [], []>} : vector<256x16xbf16>, vector<16x256xbf16>, vector<256x256xf32> -> vector<256x256xf32>
    %c0_3 = arith.constant 0 : index
    %c0_4 = arith.constant 0 : index
    %4 = vector.load %arg3[%c0_3, %c0_4] : memref<256x1xf32, #tpu.memory_space<vmem>>, vector<256x1xf32>
    %5 = vector.broadcast %4 : vector<256x1xf32> to vector<256x256xf32>
    %6 = arith.addf %3, %5 : vector<256x256xf32>
    %cst_5 = arith.constant 0.000000e+00 : f32
    %7 = vector.broadcast %cst_5 : f32 to vector<256x256xf32>
    %8 = arith.maximumf %6, %7 : vector<256x256xf32>
    %9 = arith.truncf %8 : vector<256x256xf32> to vector<256x256xbf16>
    %c0_6 = arith.constant 0 : index
    %c0_7 = arith.constant 0 : index
    %10 = vector.load %arg4[%c0_6, %c0_7] : memref<256x256xbf16, #tpu.memory_space<vmem>>, vector<256x256xbf16>
    %cst_8 = arith.constant dense<0.000000e+00> : vector<256x256xf32>
    %11 = tpu.matmul %10, %9, %cst_8 {dimension_numbers = #tpu.dot_dimension_numbers<[1], [0], [0], [1], [0, 0, 1, 1], [], []>} : vector<256x256xbf16>, vector<256x256xbf16>, vector<256x256xf32> -> vector<256x256xf32>
    %c0_9 = arith.constant 0 : index
    %c0_10 = arith.constant 0 : index
    %12 = vector.load %arg5[%c0_9, %c0_10] : memref<256x1xf32, #tpu.memory_space<vmem>>, vector<256x1xf32>
    %13 = vector.broadcast %12 : vector<256x1xf32> to vector<256x256xf32>
    %14 = arith.addf %11, %13 : vector<256x256xf32>
    %cst_11 = arith.constant 0.000000e+00 : f32
    %15 = vector.broadcast %cst_11 : f32 to vector<256x256xf32>
    %16 = arith.maximumf %14, %15 : vector<256x256xf32>
    %17 = arith.truncf %16 : vector<256x256xf32> to vector<256x256xbf16>
    %c0_12 = arith.constant 0 : index
    %c0_13 = arith.constant 0 : index
    %18 = vector.load %arg6[%c0_12, %c0_13] : memref<8x256xbf16, #tpu.memory_space<vmem>>, vector<8x256xbf16>
    %cst_14 = arith.constant dense<0.000000e+00> : vector<8x256xf32>
    %19 = tpu.matmul %18, %17, %cst_14 {dimension_numbers = #tpu.dot_dimension_numbers<[1], [0], [0], [1], [0, 0, 1, 1], [], []>} : vector<8x256xbf16>, vector<256x256xbf16>, vector<8x256xf32> -> vector<8x256xf32>
    %20 = vector.extract_strided_slice %19 {offsets = [0, 0], sizes = [1, 256], strides = [1, 1]} : vector<8x256xf32> to vector<1x256xf32>
    %c0_15 = arith.constant 0 : index
    %c0_16 = arith.constant 0 : index
    %21 = memref.load %arg7[%c0_15, %c0_16] : memref<1x1xf32, #tpu.memory_space<smem>>
    %22 = vector.broadcast %21 : f32 to vector<1x256xf32>
    %23 = arith.addf %20, %22 : vector<1x256xf32>
    %c0_17 = arith.constant 0 : index
    %c0_18 = arith.constant 0 : index
    %24 = vector.load %arg8[%c0_17, %c0_18] : memref<1x256xf32, #tpu.memory_space<vmem>>, vector<1x256xf32>
    tpu.vector_store %arg8[%c0_17, %c0_18], %23 {strides = array<i32>} : memref<1x256xf32, #tpu.memory_space<vmem>>, vector<1x256xf32>,
    return
  }
  func.func @transform_0(%arg0: i32) -> (i32, i32) {
    %c0_i32 = arith.constant 0 : i32
    %c0_i32_0 = arith.constant 0 : i32
    return %c0_i32, %arg0 : i32, i32
  }
  func.func @transform_1(%arg0: i32) -> (i32, i32) {
    %c0_i32 = arith.constant 0 : i32
    %c0_i32_0 = arith.constant 0 : i32
    %c0_i32_1 = arith.constant 0 : i32
    return %c0_i32, %c0_i32_0 : i32, i32
  }
  func.func @transform_2(%arg0: i32) -> (i32, i32) {
    %c0_i32 = arith.constant 0 : i32
    %c0_i32_0 = arith.constant 0 : i32
    %c0_i32_1 = arith.constant 0 : i32
    return %c0_i32, %c0_i32_0 : i32, i32
  }
  func.func @transform_3(%arg0: i32) -> (i32, i32) {
    %c0_i32 = arith.constant 0 : i32
    %c0_i32_0 = arith.constant 0 : i32
    %c0_i32_1 = arith.constant 0 : i32
    return %c0_i32, %c0_i32_0 : i32, i32
  }
  func.func @transform_4(%arg0: i32) -> (i32, i32) {
    %c0_i32 = arith.constant 0 : i32
    %c0_i32_0 = arith.constant 0 : i32
    %c0_i32_1 = arith.constant 0 : i32
    return %c0_i32, %c0_i32_0 : i32, i32
  }
  func.func @transform_5(%arg0: i32) -> (i32, i32) {
    %c0_i32 = arith.constant 0 : i32
    %c0_i32_0 = arith.constant 0 : i32
    %c0_i32_1 = arith.constant 0 : i32
    return %c0_i32, %c0_i32_0 : i32, i32
  }
  func.func @transform_6(%arg0: i32) -> (i32, i32) {
    %c0_i32 = arith.constant 0 : i32
    %c0_i32_0 = arith.constant 0 : i32
    %c0_i32_1 = arith.constant 0 : i32
    return %c0_i32, %c0_i32_0 : i32, i32
  }
  func.func @transform_7(%arg0: i32) -> (i32, i32) {
    %c0_i32 = arith.constant 0 : i32
    %c0_i32_0 = arith.constant 0 : i32
    return %c0_i32, %arg0 : i32, i32
  }
}

</mosaic_0001>

<llo_original>
// kernel: tpu_custom_call.1
$region0: #{tpu_custom_call.1}
  #allocation0 [shape = 'u32[]', space=smem, size = 0x4, offset = 0x4, fixed_abs, tag = 'smem constant byte address 0x4 - core index']
  #allocation1 [shape = 'u32[144,128]{1,0:T(1,128)}', space=vmem, size = 0x12000, scoped, tag = 'internal scratch']
  #allocation2 [shape = 'f32[1,1]{1,0:T(1,128)S(6)}', space=smem, size = 0x200, scoped, tag = 'scoped memory for tpu_custom_call.1']
  %s0 = inlined_call_operand.vmem [shape: f32[16,512], index: 0, kind: input, shape index: {}]
  %s1 = inlined_call_operand.vmem [shape: bf16[256,16], index: 1, kind: input, shape index: {}]
  %s2 = inlined_call_operand.vmem [shape: f32[256,1], index: 2, kind: input, shape index: {}]
  %s3 = inlined_call_operand.vmem [shape: bf16[256,256], index: 3, kind: input, shape index: {}]
  %s4 = inlined_call_operand.vmem [shape: f32[256,1], index: 4, kind: input, shape index: {}]
  %s5 = inlined_call_operand.vmem [shape: bf16[8,256], index: 5, kind: input, shape index: {}]
  %s6 = inlined_call_operand.<no memory space> [shape: f32[1,1], index: 6, kind: input, shape index: {}]
  %s7 = inlined_call_operand.hbm [shape: f32[1,512], index: 7, kind: output, shape index: {}]
  %s8 = sld [smem:[#allocation0]]
  $region84: #{tpu_custom_call.1} parent=0
    _
  %s10 = ssub.s32 1, %s8
  %s11 = scalar_select 0, %s10, %s8
  %12 = sst [smem:[#allocation2]] %s6
  $region1: #{tpu_custom_call.1} parent=0
    #allocation3 [shape = 'u8[32768]{0}', space=vmem, size = 0x8000, scoped, tag = 'input window, operand 0']
    #allocation4 [shape = 'u8[2048]{0}', space=vmem, size = 0x800, scoped, tag = 'output window, operand 0']
    #allocation5 [shape = 's32[2]{0}', space=sflag, size = 0x8, scoped, tag = 'scoped memory for tpu_custom_call.1']
    %13 = vsyncpa [#allocation5], 0
    %s14 = scalar_lea.sflag [#allocation5], 1
    %15 = vsyncpa %s14, 0
    loop: start=0, step=1, limit=4
    $region2: #{tpu_custom_call.1} parent=1 // loop_pre_header
      _
    $region3: #{tpu_custom_call.1} parent=1 // loop_header
      %s17 = sphi 0, %s21
      %p18 = scmp.ge.s32.totalorder %s17, 4
      %s27 = sphi 0, %s29
      %s30 = sphi 0, %s27
      %s31 = sphi 0, %s30
      %s47 = sphi 0, %s31
      %s51 = sphi 0, %s51
      %s53 = sphi 0, %s51
      %s54 = sphi 0, %s53
      %s68 = sphi 0, %s54
      %s72 = sphi 0, %s72
      %s74 = sphi 0, %s72
      %s75 = sphi 0, %s74
      %s89 = sphi 0, %s75
      %s93 = sphi 0, %s93
      %s95 = sphi 0, %s93
      %s96 = sphi 0, %s95
      %s110 = sphi 0, %s96
      %s114 = sphi 0, %s114
      %s116 = sphi 0, %s114
      %s117 = sphi 0, %s116
      %s131 = sphi 0, %s117
      %s135 = sphi 0, %s135
      %s137 = sphi 0, %s135
      %s138 = sphi 0, %s137
      %s152 = sphi 0, %s138
      %s156 = sphi 0, %s156
      %s158 = sphi 0, %s156
      %s159 = sphi 0, %s158
      %s173 = sphi 0, %s159
      %s179 = sphi 0, %s181
      %s182 = sphi 0, %s179
      %s183 = sphi 0, %s182
      %s199 = sphi 0, %s183
    $region4: #{tpu_custom_call.1} parent=1 // loop_header_branch
      %20 = sbr.rel (%p18) target = $region8
    $region5: #{tpu_custom_call.1} parent=1 // loop_body
      %s22 = ssub.s32 %s17, 1
      %s23 = ssub.s32 %s17, 2
      %s24 = sadd.s32 %s17, 1
      %s25 = ssub.s32 %s17, %s24
      %p26 = scmp.eq.s32.totalorder %s25, 0
      %s28 = sadd.s32 %s27, 1
      %s29 = scalar_select %p26, %s27, %s28
      %p32 = pneg %p26
      %p33 = scmp.eq.s32.totalorder %s17, 1
      %p34 = por %p32, %p33
      %p35 = scmp.ne.s32.totalorder %s27, %s30
      %p36 = scmp.eq.s32.totalorder %s17, 0
      %p37 = por %p35, %p36
      %p38 = scmp.ne.s32.totalorder %s27, %s30
      %p39 = scmp.eq.s32.totalorder %s22, 1
      %p40 = por %p38, %p39
      %p41 = scmp.ne.s32.totalorder %s30, %s31
      %p42 = scmp.eq.s32.totalorder %s22, 0
      %p43 = por %p41, %p42
      %p44 = scmp.ne.s32.totalorder %s30, %s31
      %p45 = scmp.eq.s32.totalorder %s23, 1
      %p46 = por %p44, %p45
      %p48 = scmp.ne.s32.totalorder %s31, %s47
      %p49 = scmp.eq.s32.totalorder %s23, 0
      %p50 = por %p48, %p49
      %s52 = sadd.s32 %s51, 1
      %p55 = scmp.eq.s32.totalorder %s17, 1
      %p56 = scmp.ne.s32.totalorder %s51, %s53
      %p57 = scmp.eq.s32.totalorder %s17, 0
      %p58 = por %p56, %p57
      %p59 = scmp.ne.s32.totalorder %s51, %s53
      %p60 = scmp.eq.s32.totalorder %s22, 1
      %p61 = por %p59, %p60
      %p62 = scmp.ne.s32.totalorder %s53, %s54
      %p63 = scmp.eq.s32.totalorder %s22, 0
      %p64 = por %p62, %p63
      %p65 = scmp.ne.s32.totalorder %s53, %s54
      %p66 = scmp.eq.s32.totalorder %s23, 1
      %p67 = por %p65, %p66
      %p69 = scmp.ne.s32.totalorder %s54, %s68
      %p70 = scmp.eq.s32.totalorder %s23, 0
      %p71 = por %p69, %p70
      %s73 = sadd.s32 %s72, 1
      %p76 = scmp.eq.s32.totalorder %s17, 1
      %p77 = scmp.ne.s32.totalorder %s72, %s74
      %p78 = scmp.eq.s32.totalorder %s17, 0
      %p79 = por %p77, %p78
      %p80 = scmp.ne.s32.totalorder %s72, %s74
      %p81 = scmp.eq.s32.totalorder %s22, 1
      %p82 = por %p80, %p81
      %p83 = scmp.ne.s32.totalorder %s74, %s75
      %p84 = scmp.eq.s32.totalorder %s22, 0
      %p85 = por %p83, %p84
      %p86 = scmp.ne.s32.totalorder %s74, %s75
      %p87 = scmp.eq.s32.totalorder %s23, 1
      %p88 = por %p86, %p87
      %p90 = scmp.ne.s32.totalorder %s75, %s89
      %p91 = scmp.eq.s32.totalorder %s23, 0
      %p92 = por %p90, %p91
      %s94 = sadd.s32 %s93, 1
      %p97 = scmp.eq.s32.totalorder %s17, 1
      %p98 = scmp.ne.s32.totalorder %s93, %s95
      %p99 = scmp.eq.s32.totalorder %s17, 0
      %p100 = por %p98, %p99
      %p101 = scmp.ne.s32.totalorder %s93, %s95
      %p102 = scmp.eq.s32.totalorder %s22, 1
      %p103 = por %p101, %p102
      %p104 = scmp.ne.s32.totalorder %s95, %s96
      %p105 = scmp.eq.s32.totalorder %s22, 0
      %p106 = por %p104, %p105
      %p107 = scmp.ne.s32.totalorder %s95, %s96
      %p108 = scmp.eq.s32.totalorder %s23, 1
      %p109 = por %p107, %p108
      %p111 = scmp.ne.s32.totalorder %s96, %s110
      %p112 = scmp.eq.s32.totalorder %s23, 0
      %p113 = por %p111, %p112
      %s115 = sadd.s32 %s114, 1
      %p118 = scmp.eq.s32.totalorder %s17, 1
      %p119 = scmp.ne.s32.totalorder %s114, %s116
      %p120 = scmp.eq.s32.totalorder %s17, 0
      %p121 = por %p119, %p120
      %p122 = scmp.ne.s32.totalorder %s114, %s116
      %p123 = scmp.eq.s32.totalorder %s22, 1
      %p124 = por %p122, %p123
      %p125 = scmp.ne.s32.totalorder %s116, %s117
      %p126 = scmp.eq.s32.totalorder %s22, 0
      %p127 = por %p125, %p126
      %p128 = scmp.ne.s32.totalorder %s116, %s117
      %p129 = scmp.eq.s32.totalorder %s23, 1
      %p130 = por %p128, %p129
      %p132 = scmp.ne.s32.totalorder %s117, %s131
      %p133 = scmp.eq.s32.totalorder %s23, 0
      %p134 = por %p132, %p133
      %s136 = sadd.s32 %s135, 1
      %p139 = scmp.eq.s32.totalorder %s17, 1
      %p140 = scmp.ne.s32.totalorder %s135, %s137
      %p141 = scmp.eq.s32.totalorder %s17, 0
      %p142 = por %p140, %p141
      %p143 = scmp.ne.s32.totalorder %s135, %s137
      %p144 = scmp.eq.s32.totalorder %s22, 1
      %p145 = por %p143, %p144
      %p146 = scmp.ne.s32.totalorder %s137, %s138
      %p147 = scmp.eq.s32.totalorder %s22, 0
      %p148 = por %p146, %p147
      %p149 = scmp.ne.s32.totalorder %s137, %s138
      %p150 = scmp.eq.s32.totalorder %s23, 1
      %p151 = por %p149, %p150
      %p153 = scmp.ne.s32.totalorder %s138, %s152
      %p154 = scmp.eq.s32.totalorder %s23, 0
      %p155 = por %p153, %p154
      %s157 = sadd.s32 %s156, 1
      %p160 = scmp.eq.s32.totalorder %s17, 1
      %p161 = scmp.ne.s32.totalorder %s156, %s158
      %p162 = scmp.eq.s32.totalorder %s17, 0
      %p163 = por %p161, %p162
      %p164 = scmp.ne.s32.totalorder %s156, %s158
      %p165 = scmp.eq.s32.totalorder %s22, 1
      %p166 = por %p164, %p165
      %p167 = scmp.ne.s32.totalorder %s158, %s159
      %p168 = scmp.eq.s32.totalorder %s22, 0
      %p169 = por %p167, %p168
      %p170 = scmp.ne.s32.totalorder %s158, %s159
      %p171 = scmp.eq.s32.totalorder %s23, 1
      %p172 = por %p170, %p171
      %p174 = scmp.ne.s32.totalorder %s159, %s173
      %p175 = scmp.eq.s32.totalorder %s23, 0
      %p176 = por %p174, %p175
      %s177 = ssub.s32 %s17, %s24
      %p178 = scmp.eq.s32.totalorder %s177, 0
      %s180 = sadd.s32 %s179, 1
      %s181 = scalar_select %p178, %s179, %s180
      %p184 = pneg %p178
      %p185 = scmp.eq.s32.totalorder %s17, 1
      %p186 = por %p184, %p185
      %p187 = scmp.ne.s32.totalorder %s179, %s182
      %p188 = scmp.eq.s32.totalorder %s17, 0
      %p189 = por %p187, %p188
      %p190 = scmp.ne.s32.totalorder %s179, %s182
      %p191 = scmp.eq.s32.totalorder %s22, 1
      %p192 = por %p190, %p191
      %p193 = scmp.ne.s32.totalorder %s182, %s183
      %p194 = scmp.eq.s32.totalorder %s22, 0
      %p195 = por %p193, %p194
      %p196 = scmp.ne.s32.totalorder %s182, %s183
      %p197 = scmp.eq.s32.totalorder %s23, 1
      %p198 = por %p196, %p197
      %p200 = scmp.ne.s32.totalorder %s183, %s199
      %p201 = scmp.eq.s32.totalorder %s23, 0
      %p202 = por %p200, %p201
      %p203 = scmp.le.s32.totalorder 1, %s17
      %p204 = scmp.lt.s32.totalorder %s17, 3
      %p205 = pnand %p203, %p204
      %p206 = pneg %p205
      // Predicated region
      $region9: #{tpu_custom_call.1} parent=5 // pred_check
        _
      $region10: #{tpu_custom_call.1} parent=5 // pred_check_branch
        %208 = sbr.rel (%p205) target = $region12
      $region11: #{tpu_custom_call.1} parent=5 // pred_region
        %s209 = ssub.s32 %s17, 1
        // Predicated region
        $region13: #{tpu_custom_call.1} parent=11 // pred_check
          %p210 = pneg %p64
        $region14: #{tpu_custom_call.1} parent=11 // pred_check_branch
          %212 = sbr.rel (%p210) target = $region16
        $region15: #{tpu_custom_call.1} parent=11 // pred_region
          _
        $region16: #{tpu_custom_call.1} parent=11 // pred_fallthru
          _
        // Predicated region
        $region17: #{tpu_custom_call.1} parent=11 // pred_check
          %p213 = pneg %p85
        $region18: #{tpu_custom_call.1} parent=11 // pred_check_branch
          %215 = sbr.rel (%p213) target = $region20
        $region19: #{tpu_custom_call.1} parent=11 // pred_region
          _
        $region20: #{tpu_custom_call.1} parent=11 // pred_fallthru
          _
        // Predicated region
        $region21: #{tpu_custom_call.1} parent=11 // pred_check
          %p216 = pneg %p106
        $region22: #{tpu_custom_call.1} parent=11 // pred_check_branch
          %218 = sbr.rel (%p216) target = $region24
        $region23: #{tpu_custom_call.1} parent=11 // pred_region
          _
        $region24: #{tpu_custom_call.1} parent=11 // pred_fallthru
          _
        // Predicated region
        $region25: #{tpu_custom_call.1} parent=11 // pred_check
          %p219 = pneg %p127
        $region26: #{tpu_custom_call.1} parent=11 // pred_check_branch
          %221 = sbr.rel (%p219) target = $region28
        $region27: #{tpu_custom_call.1} parent=11 // pred_region
          _
        $region28: #{tpu_custom_call.1} parent=11 // pred_fallthru
          _
        // Predicated region
        $region29: #{tpu_custom_call.1} parent=11 // pred_check
          %p222 = pneg %p148
        $region30: #{tpu_custom_call.1} parent=11 // pred_check_branch
          %224 = sbr.rel (%p222) target = $region32
        $region31: #{tpu_custom_call.1} parent=11 // pred_region
          _
        $region32: #{tpu_custom_call.1} parent=11 // pred_fallthru
          _
        // Predicated region
        $region33: #{tpu_custom_call.1} parent=11 // pred_check
          %p225 = pneg %p169
        $region34: #{tpu_custom_call.1} parent=11 // pred_check_branch
          %227 = sbr.rel (%p225) target = $region36
        $region35: #{tpu_custom_call.1} parent=11 // pred_region
          _
        $region36: #{tpu_custom_call.1} parent=11 // pred_fallthru
          _
      $region12: #{tpu_custom_call.1} parent=5 // pred_fallthru
        _
      %p228 = scmp.lt.s32.totalorder %s17, 2
      // Predicated region
      $region37: #{tpu_custom_call.1} parent=5 // pred_check
        %p229 = pneg %p228
      $region38: #{tpu_custom_call.1} parent=5 // pred_check_branch
        %231 = sbr.rel (%p229) target = $region40
      $region39: #{tpu_custom_call.1} parent=5 // pred_region
        // Predicated region
        $region41: #{tpu_custom_call.1} parent=39 // pred_check
          %p232 = pneg %p37
        $region42: #{tpu_custom_call.1} parent=39 // pred_check_branch
          %234 = sbr.rel (%p232) target = $region44
        $region43: #{tpu_custom_call.1} parent=39 // pred_region
          %s235 = sand.u32 %s27, 1
          %s236 = sand.u32 %s27, 1
          %s237 = smul.addr %s236, 32
          %s238 = scalar_lea.vmem [#allocation3], %s237
          %s239 = smul.u32 2, %s17
          %s240 = smul.addr %s239, 8
          %s241 = scalar_lea.vmem %s0, %s240
          // Predicated region
          $region45: #{tpu_custom_call.1} parent=43 // pred_check
            _
          $region46: #{tpu_custom_call.1} parent=43 // pred_check_branch
            %243 = sbr.rel (0) target = $region48
          $region47: #{tpu_custom_call.1} parent=43 // pred_region
            // Predicated region
            $region49: #{tpu_custom_call.1} parent=47 // pred_check
              _
            $region50: #{tpu_custom_call.1} parent=47 // pred_check_branch
              %245 = sbr.rel (0) target = $region52
            $region51: #{tpu_custom_call.1} parent=47 // pred_region
              loop: start=0, step=1, limit=1
              $region53: #{tpu_custom_call.1} parent=51 // loop_pre_header
                _
              $region54: #{tpu_custom_call.1} parent=51 // loop_header
                %s247 = sphi 0, %s251
                %p248 = scmp.ge.s32.totalorder %s247, 1
                %s252 = sphi %s241, %s241
                %s253 = sphi %s238, %s238
              $region55: #{tpu_custom_call.1} parent=51 // loop_header_branch
                %250 = sbr.rel (%p248) target = $region59
              $region56: #{tpu_custom_call.1} parent=51 // loop_body
                %v254 = vld [vmem:[%s252] sm:$0xff]
                %255 = vst [vmem:[%s253] sm:$0xff] %v254
                %v256 = vld [vmem:[%s252 + $0x8] sm:$0xff]
                %257 = vst [vmem:[%s253 + $0x8] sm:$0xff] %v256
                %v258 = vld [vmem:[%s252 + $0x20] sm:$0xff]
                %259 = vst [vmem:[%s253 + $0x10] sm:$0xff] %v258
                %v260 = vld [vmem:[%s252 + $0x28] sm:$0xff]
                %261 = vst [vmem:[%s253 + $0x18] sm:$0xff] %v260
              $region57: #{tpu_custom_call.1} parent=51 // loop_footer
                %s251 = sadd.s32 1, %s247
              $region58: #{tpu_custom_call.1} parent=51 // loop_footer_branch
                %246 = sbr.rel target = $region54
              $region59: #{tpu_custom_call.1} parent=51 // loop_exit
                _
            $region52: #{tpu_custom_call.1} parent=47 // pred_fallthru
              _
            // Predicated region
            $region60: #{tpu_custom_call.1} parent=47 // pred_check
              _
            $region61: #{tpu_custom_call.1} parent=47 // pred_check_branch
              %263 = sbr.rel target = $region63
            $region62: #{tpu_custom_call.1} parent=47 // pred_region
              _
            $region63: #{tpu_custom_call.1} parent=47 // pred_fallthru
              _
          $region48: #{tpu_custom_call.1} parent=43 // pred_fallthru
            _
          %264 = vnop
        $region44: #{tpu_custom_call.1} parent=39 // pred_fallthru
          _
      $region40: #{tpu_custom_call.1} parent=5 // pred_fallthru
        _
      %p265 = scmp.le.s32.totalorder 1, %s17
      %p266 = scmp.lt.s32.totalorder %s17, 3
      %p267 = pnand %p265, %p266
      %p268 = pneg %p267
      // Predicated region
      $region64: #{tpu_custom_call.1} parent=5 // pred_check
        _
      $region65: #{tpu_custom_call.1} parent=5 // pred_check_branch
        %270 = sbr.rel (%p267) target = $region67
      $region66: #{tpu_custom_call.1} parent=5 // pred_region
        %s271 = ssub.s32 %s17, 1
        %s272 = sand.u32 %s30, 1
        %s273 = sand.u32 %s30, 1
        %s274 = smul.addr %s273, 32
        %s275 = scalar_lea.vmem [#allocation3], %s274
        // Predicated region
        $region68: #{tpu_custom_call.1} parent=66 // pred_check
          %p276 = pneg %p43
        $region69: #{tpu_custom_call.1} parent=66 // pred_check_branch
          %278 = sbr.rel (%p276) target = $region71
        $region70: #{tpu_custom_call.1} parent=66 // pred_region
          _
        $region71: #{tpu_custom_call.1} parent=66 // pred_fallthru
          _
        %s279 = sand.u32 %s30, 1
        %s280 = sand.u32 %s30, 1
        %s281 = smul.addr %s280, 32
        %s282 = scalar_lea.vmem [#allocation3], %s281
        %p283 = pneg %p43
        %p284 = pneg %p40
        %p285 = pneg %p64
        %p286 = pneg %p61
        %p287 = pneg %p85
        %p288 = pneg %p82
        %p289 = pneg %p106
        %p290 = pneg %p103
        %p291 = pneg %p127
        %p292 = pneg %p124
        %p293 = pneg %p148
        %p294 = pneg %p145
        %p295 = pneg %p169
        %p296 = pneg %p166
        %p297 = pneg %p195
        %p298 = pneg %p192
        %s299 = sand.u32 %s182, 1
        %s300 = scalar_lea.sflag [#allocation5], %s299
        %s301 = sand.u32 %s182, 1
        %s302 = smul.addr %s301, 2
        %s303 = scalar_lea.vmem [#allocation4], %s302
        %s304 = smul.u32 2, %s22
        %s305 = smul.u32 2, %s22
        %v307 = vld [vmem:[%s275] sm:$0xff]
        %v308 = vld [vmem:[%s275 + $0x8] sm:$0xff]
        %v309 = vld [vmem:[%s275 + $0x10] sm:$0xff]
        %v310 = vld [vmem:[%s275 + $0x18] sm:$0xff]
        %v311 = vpack.c.bf16 %v309, %v307
        %v312 = vpack.c.bf16 %v310, %v308
        %v313 = vld [vmem:[%s1] sm:$0xf]
        %v314 = vld [vmem:[%s1 + $0x4] sm:$0xf]
        %v315 = vld [vmem:[%s1 + $0x8] sm:$0xf]
        %v316 = vld [vmem:[%s1 + $0xc] sm:$0xf]
        %v317 = vld [vmem:[%s1 + $0x10] sm:$0xf]
        %v318 = vld [vmem:[%s1 + $0x14] sm:$0xf]
        %v319 = vld [vmem:[%s1 + $0x18] sm:$0xf]
        %v320 = vld [vmem:[%s1 + $0x1c] sm:$0xf]
        %v321 = vld [vmem:[%s1 + $0x20] sm:$0xf]
        %v322 = vld [vmem:[%s1 + $0x24] sm:$0xf]
        %v323 = vld [vmem:[%s1 + $0x28] sm:$0xf]
        %v324 = vld [vmem:[%s1 + $0x2c] sm:$0xf]
        %v325 = vld [vmem:[%s1 + $0x30] sm:$0xf]
        %v326 = vld [vmem:[%s1 + $0x34] sm:$0xf]
        %v327 = vld [vmem:[%s1 + $0x38] sm:$0xf]
        %v328 = vld [vmem:[%s1 + $0x3c] sm:$0xf]
        %v329 = vld [vmem:[%s1 + $0x40] sm:$0xf]
        %v330 = vld [vmem:[%s1 + $0x44] sm:$0xf]
        %v331 = vld [vmem:[%s1 + $0x48] sm:$0xf]
        %v332 = vld [vmem:[%s1 + $0x4c] sm:$0xf]
        %v333 = vld [vmem:[%s1 + $0x50] sm:$0xf]
        %v334 = vld [vmem:[%s1 + $0x54] sm:$0xf]
        %v335 = vld [vmem:[%s1 + $0x58] sm:$0xf]
        %v336 = vld [vmem:[%s1 + $0x5c] sm:$0xf]
        %v337 = vld [vmem:[%s1 + $0x60] sm:$0xf]
        %v338 = vld [vmem:[%s1 + $0x64] sm:$0xf]
        %v339 = vld [vmem:[%s1 + $0x68] sm:$0xf]
        %v340 = vld [vmem:[%s1 + $0x6c] sm:$0xf]
        %v341 = vld [vmem:[%s1 + $0x70] sm:$0xf]
        %v342 = vld [vmem:[%s1 + $0x74] sm:$0xf]
        %v343 = vld [vmem:[%s1 + $0x78] sm:$0xf]
        %v344 = vld [vmem:[%s1 + $0x7c] sm:$0xf]
        %v345 = vld [vmem:[%s2] sm:$0xff]
        %v346 = vld [vmem:[%s2 + $0x8] sm:$0xff]
        %v347 = vld [vmem:[%s2 + $0x10] sm:$0xff]
        %v348 = vld [vmem:[%s2 + $0x18] sm:$0xff]
        %v349 = vld [vmem:[%s2 + $0x20] sm:$0xff]
        %v350 = vld [vmem:[%s2 + $0x28] sm:$0xff]
        %v351 = vld [vmem:[%s2 + $0x30] sm:$0xff]
        %v352 = vld [vmem:[%s2 + $0x38] sm:$0xff]
        %v353 = vld [vmem:[%s2 + $0x40] sm:$0xff]
        %v354 = vld [vmem:[%s2 + $0x48] sm:$0xff]
        %v355 = vld [vmem:[%s2 + $0x50] sm:$0xff]
        %v356 = vld [vmem:[%s2 + $0x58] sm:$0xff]
        %v357 = vld [vmem:[%s2 + $0x60] sm:$0xff]
        %v358 = vld [vmem:[%s2 + $0x68] sm:$0xff]
        %v359 = vld [vmem:[%s2 + $0x70] sm:$0xff]
        %v360 = vld [vmem:[%s2 + $0x78] sm:$0xff]
        %v361 = vld [vmem:[%s2 + $0x80] sm:$0xff]
        %v362 = vld [vmem:[%s2 + $0x88] sm:$0xff]
        %v363 = vld [vmem:[%s2 + $0x90] sm:$0xff]
        %v364 = vld [vmem:[%s2 + $0x98] sm:$0xff]
        %v365 = vld [vmem:[%s2 + $0xa0] sm:$0xff]
        %v366 = vld [vmem:[%s2 + $0xa8] sm:$0xff]
        %v367 = vld [vmem:[%s2 + $0xb0] sm:$0xff]
        %v368 = vld [vmem:[%s2 + $0xb8] sm:$0xff]
        %v369 = vld [vmem:[%s2 + $0xc0] sm:$0xff]
        %v370 = vld [vmem:[%s2 + $0xc8] sm:$0xff]
        %v371 = vld [vmem:[%s2 + $0xd0] sm:$0xff]
        %v372 = vld [vmem:[%s2 + $0xd8] sm:$0xff]
        %v373 = vld [vmem:[%s2 + $0xe0] sm:$0xff]
        %v374 = vld [vmem:[%s2 + $0xe8] sm:$0xff]
        %v375 = vld [vmem:[%s2 + $0xf0] sm:$0xff]
        %v376 = vld [vmem:[%s2 + $0xf8] sm:$0xff]
        %378 = vset.pattern.permute.xlu0 0
        %379 = vperm.xlu0 %378, %v345
        %v380 = vpop.permute.xlu0 %379
        %383 = vset.pattern.permute.xlu0 0
        %384 = vperm.xlu0 %383, %v346
        %v385 = vpop.permute.xlu0 %384
        %388 = vset.pattern.permute.xlu0 0
        %389 = vperm.xlu0 %388, %v347
        %v390 = vpop.permute.xlu0 %389
        %393 = vset.pattern.permute.xlu0 0
        %394 = vperm.xlu0 %393, %v348
        %v395 = vpop.permute.xlu0 %394
        %398 = vset.pattern.permute.xlu0 0
        %399 = vperm.xlu0 %398, %v349
        %v400 = vpop.permute.xlu0 %399
        %403 = vset.pattern.permute.xlu0 0
        %404 = vperm.xlu0 %403, %v350
        %v405 = vpop.permute.xlu0 %404
        %408 = vset.pattern.permute.xlu0 0
        %409 = vperm.xlu0 %408, %v351
        %v410 = vpop.permute.xlu0 %409
        %413 = vset.pattern.permute.xlu0 0
        %414 = vperm.xlu0 %413, %v352
        %v415 = vpop.permute.xlu0 %414
        %418 = vset.pattern.permute.xlu0 0
        %419 = vperm.xlu0 %418, %v353
        %v420 = vpop.permute.xlu0 %419
        %423 = vset.pattern.permute.xlu0 0
        %424 = vperm.xlu0 %423, %v354
        %v425 = vpop.permute.xlu0 %424
        %428 = vset.pattern.permute.xlu0 0
        %429 = vperm.xlu0 %428, %v355
        %v430 = vpop.permute.xlu0 %429
        %433 = vset.pattern.permute.xlu0 0
        %434 = vperm.xlu0 %433, %v356
        %v435 = vpop.permute.xlu0 %434
        %438 = vset.pattern.permute.xlu0 0
        %439 = vperm.xlu0 %438, %v357
        %v440 = vpop.permute.xlu0 %439
        %443 = vset.pattern.permute.xlu0 0
        %444 = vperm.xlu0 %443, %v358
        %v445 = vpop.permute.xlu0 %444
        %448 = vset.pattern.permute.xlu0 0
        %449 = vperm.xlu0 %448, %v359
        %v450 = vpop.permute.xlu0 %449
        %453 = vset.pattern.permute.xlu0 0
        %454 = vperm.xlu0 %453, %v360
        %v455 = vpop.permute.xlu0 %454
        %458 = vset.pattern.permute.xlu0 0
        %459 = vperm.xlu0 %458, %v361
        %v460 = vpop.permute.xlu0 %459
        %463 = vset.pattern.permute.xlu0 0
        %464 = vperm.xlu0 %463, %v362
        %v465 = vpop.permute.xlu0 %464
        %468 = vset.pattern.permute.xlu0 0
        %469 = vperm.xlu0 %468, %v363
        %v470 = vpop.permute.xlu0 %469
        %473 = vset.pattern.permute.xlu0 0
        %474 = vperm.xlu0 %473, %v364
        %v475 = vpop.permute.xlu0 %474
        %478 = vset.pattern.permute.xlu0 0
        %479 = vperm.xlu0 %478, %v365
        %v480 = vpop.permute.xlu0 %479
        %483 = vset.pattern.permute.xlu0 0
        %484 = vperm.xlu0 %483, %v366
        %v485 = vpop.permute.xlu0 %484
        %488 = vset.pattern.permute.xlu0 0
        %489 = vperm.xlu0 %488, %v367
        %v490 = vpop.permute.xlu0 %489
        %493 = vset.pattern.permute.xlu0 0
        %494 = vperm.xlu0 %493, %v368
        %v495 = vpop.permute.xlu0 %494
        %498 = vset.pattern.permute.xlu0 0
        %499 = vperm.xlu0 %498, %v369
        %v500 = vpop.permute.xlu0 %499
        %503 = vset.pattern.permute.xlu0 0
        %504 = vperm.xlu0 %503, %v370
        %v505 = vpop.permute.xlu0 %504
        %508 = vset.pattern.permute.xlu0 0
        %509 = vperm.xlu0 %508, %v371
        %v510 = vpop.permute.xlu0 %509
        %513 = vset.pattern.permute.xlu0 0
        %514 = vperm.xlu0 %513, %v372
        %v515 = vpop.permute.xlu0 %514
        %518 = vset.pattern.permute.xlu0 0
        %519 = vperm.xlu0 %518, %v373
        %v520 = vpop.permute.xlu0 %519
        %523 = vset.pattern.permute.xlu0 0
        %524 = vperm.xlu0 %523, %v374
        %v525 = vpop.permute.xlu0 %524
        %528 = vset.pattern.permute.xlu0 0
        %529 = vperm.xlu0 %528, %v375
        %v530 = vpop.permute.xlu0 %529
        %533 = vset.pattern.permute.xlu0 0
        %534 = vperm.xlu0 %533, %v376
        %v535 = vpop.permute.xlu0 %534
        %v569 = vunpack.c.l.b16 %v313
        %v570 = vunpack.c.l.b16 %v314
        %v571 = vunpack.c.l.b16 %v315
        %v572 = vunpack.c.l.b16 %v316
        %v573 = vunpack.c.l.b16 %v317
        %v574 = vunpack.c.l.b16 %v318
        %v575 = vunpack.c.l.b16 %v319
        %v576 = vunpack.c.l.b16 %v320
        %v577 = vunpack.c.l.b16 %v321
        %v578 = vunpack.c.l.b16 %v322
        %v579 = vunpack.c.l.b16 %v323
        %v580 = vunpack.c.l.b16 %v324
        %v581 = vunpack.c.l.b16 %v325
        %v582 = vunpack.c.l.b16 %v326
        %v583 = vunpack.c.l.b16 %v327
        %v584 = vunpack.c.l.b16 %v328
        %v585 = vunpack.c.l.b16 %v329
        %v586 = vunpack.c.l.b16 %v330
        %v587 = vunpack.c.l.b16 %v331
        %v588 = vunpack.c.l.b16 %v332
        %v589 = vunpack.c.l.b16 %v333
        %v590 = vunpack.c.l.b16 %v334
        %v591 = vunpack.c.l.b16 %v335
        %v592 = vunpack.c.l.b16 %v336
        %v593 = vunpack.c.l.b16 %v337
        %v594 = vunpack.c.l.b16 %v338
        %v595 = vunpack.c.l.b16 %v339
        %v596 = vunpack.c.l.b16 %v340
        %v597 = vunpack.c.l.b16 %v341
        %v598 = vunpack.c.l.b16 %v342
        %v599 = vunpack.c.l.b16 %v343
        %v600 = vunpack.c.l.b16 %v344
        %v601 = vpack.c.b16 %v570, %v569
        %v602 = vpack.c.b16 %v572, %v571
        %v603 = vpack.c.b16 %v574, %v573
        %v604 = vpack.c.b16 %v576, %v575
        %v605 = vpack.c.b16 %v578, %v577
        %v606 = vpack.c.b16 %v580, %v579
        %v607 = vpack.c.b16 %v582, %v581
        %v608 = vpack.c.b16 %v584, %v583
        %v609 = vpack.c.b16 %v586, %v585
        %v610 = vpack.c.b16 %v588, %v587
        %v611 = vpack.c.b16 %v590, %v589
        %v612 = vpack.c.b16 %v592, %v591
        %v613 = vpack.c.b16 %v594, %v593
        %v614 = vpack.c.b16 %v596, %v595
        %v615 = vpack.c.b16 %v598, %v597
        %v616 = vpack.c.b16 %v600, %v599
        %vm617 = vcmask 130048
        %v619 = vsel %vm617, %v601, 0
        %v622 = vsel %vm617, %v602, 0
        %v625 = vsel %vm617, %v603, 0
        %v628 = vsel %vm617, %v604, 0
        %v631 = vsel %vm617, %v605, 0
        %v634 = vsel %vm617, %v606, 0
        %v637 = vsel %vm617, %v607, 0
        %v640 = vsel %vm617, %v608, 0
        %v643 = vsel %vm617, %v609, 0
        %v646 = vsel %vm617, %v610, 0
        %v649 = vsel %vm617, %v611, 0
        %v652 = vsel %vm617, %v612, 0
        %v655 = vsel %vm617, %v613, 0
        %v658 = vsel %vm617, %v614, 0
        %v661 = vsel %vm617, %v615, 0
        %v664 = vsel %vm617, %v616, 0
        %666 = vmatprep.subr.bf16.mxu0 0
        %667 = vmatpush1.bf16.msra.mxu0 0
        %668 = vmatprep.subr.bf16.mxu0 0
        %669 = vmatpush1.bf16.msra.mxu0 0
        %670 = vmatprep.subr.bf16.mxu0 0
        %671 = vmatpush1.bf16.msra.mxu0 0
        %672 = vmatprep.subr.bf16.mxu0 0
        %673 = vmatpush1.bf16.msra.mxu0 0
        %674 = vmatprep.subr.bf16.mxu0 0
        %675 = vmatpush1.bf16.msra.mxu0 0
        %676 = vmatprep.subr.bf16.mxu0 0
        %677 = vmatpush1.bf16.msra.mxu0 0
        %678 = vmatprep.subr.bf16.mxu0 0
        %679 = vmatpush1.bf16.msra.mxu0 0
        %680 = vmatprep.subr.bf16.mxu0 %v312
        %681 = vmatpush1.bf16.msra.mxu0 %v311
        %682 = vmatprep.subr.bf16.mxu0 0
        %683 = vmatpush2.bf16.msra.mxu0 0
        %684 = vmatprep.subr.bf16.mxu0 0
        %685 = vmatpush2.bf16.msra.mxu0 0
        %686 = vmatprep.subr.bf16.mxu0 0
        %687 = vmatpush2.bf16.msra.mxu0 0
        %688 = vmatprep.subr.bf16.mxu0 0
        %689 = vmatpush2.bf16.msra.mxu0 0
        %690 = vmatprep.subr.bf16.mxu0 0
        %691 = vmatpush2.bf16.msra.mxu0 0
        %692 = vmatprep.subr.bf16.mxu0 0
        %693 = vmatpush2.bf16.msra.mxu0 0
        %694 = vmatprep.subr.bf16.mxu0 0
        %695 = vmatpush2.bf16.msra.mxu0 0
        %696 = vmatprep.subr.bf16.mxu0 0
        %697 = vmatpush2.bf16.msra.mxu0 0
        %698 = vmatprep.mubr.bf16.mxu0 0
        %699 = vmatmul.mubr.bf16.gmra.mxu0 %v619
        %v700 = vpop.f32.mrf.mxu0
        %v701 = vadd.f32 %v380, %v700
        %v702 = vpop.f32.mrf.mxu0
        %v703 = vadd.f32 %v380, %v702
        %v704 = vpop.f32.mrf.mxu0
        %v705 = vadd.f32 %v385, %v704
        %v706 = vpop.f32.mrf.mxu0
        %v707 = vadd.f32 %v385, %v706
        %708 = vmatprep.mubr.bf16.mxu0 0
        %709 = vmatmul.mubr.bf16.gmra.mxu0 %v622
        %v710 = vpop.f32.mrf.mxu0
        %v711 = vadd.f32 %v390, %v710
        %v712 = vpop.f32.mrf.mxu0
        %v713 = vadd.f32 %v390, %v712
        %v714 = vpop.f32.mrf.mxu0
        %v715 = vadd.f32 %v395, %v714
        %v716 = vpop.f32.mrf.mxu0
        %v717 = vadd.f32 %v395, %v716
        %718 = vmatprep.mubr.bf16.mxu0 0
        %719 = vmatmul.mubr.bf16.gmra.mxu0 %v625
        %v720 = vpop.f32.mrf.mxu0
        %v721 = vadd.f32 %v400, %v720
        %v722 = vpop.f32.mrf.mxu0
        %v723 = vadd.f32 %v400, %v722
        %v724 = vpop.f32.mrf.mxu0
        %v725 = vadd.f32 %v405, %v724
        %v726 = vpop.f32.mrf.mxu0
        %v727 = vadd.f32 %v405, %v726
        %728 = vmatprep.mubr.bf16.mxu0 0
        %729 = vmatmul.mubr.bf16.gmra.mxu0 %v628
        %v730 = vpop.f32.mrf.mxu0
        %v731 = vadd.f32 %v410, %v730
        %v732 = vpop.f32.mrf.mxu0
        %v733 = vadd.f32 %v410, %v732
        %v734 = vpop.f32.mrf.mxu0
        %v735 = vadd.f32 %v415, %v734
        %v736 = vpop.f32.mrf.mxu0
        %v737 = vadd.f32 %v415, %v736
        %738 = vmatprep.mubr.bf16.mxu0 0
        %739 = vmatmul.mubr.bf16.gmra.mxu0 %v631
        %v740 = vpop.f32.mrf.mxu0
        %v741 = vadd.f32 %v420, %v740
        %v742 = vpop.f32.mrf.mxu0
        %v743 = vadd.f32 %v420, %v742
        %v744 = vpop.f32.mrf.mxu0
        %v745 = vadd.f32 %v425, %v744
        %v746 = vpop.f32.mrf.mxu0
        %v747 = vadd.f32 %v425, %v746
        %748 = vmatprep.mubr.bf16.mxu0 0
        %749 = vmatmul.mubr.bf16.gmra.mxu0 %v634
        %v750 = vpop.f32.mrf.mxu0
        %v751 = vadd.f32 %v430, %v750
        %v752 = vpop.f32.mrf.mxu0
        %v753 = vadd.f32 %v430, %v752
        %v754 = vpop.f32.mrf.mxu0
        %v755 = vadd.f32 %v435, %v754
        %v756 = vpop.f32.mrf.mxu0
        %v757 = vadd.f32 %v435, %v756
        %758 = vmatprep.mubr.bf16.mxu0 0
        %759 = vmatmul.mubr.bf16.gmra.mxu0 %v637
        %v760 = vpop.f32.mrf.mxu0
        %v761 = vadd.f32 %v440, %v760
        %v762 = vpop.f32.mrf.mxu0
        %v763 = vadd.f32 %v440, %v762
        %v764 = vpop.f32.mrf.mxu0
        %v765 = vadd.f32 %v445, %v764
        %v766 = vpop.f32.mrf.mxu0
        %v767 = vadd.f32 %v445, %v766
        %768 = vmatprep.mubr.bf16.mxu0 0
        %769 = vmatmul.mubr.bf16.gmra.mxu0 %v640
        %v770 = vpop.f32.mrf.mxu0
        %v771 = vadd.f32 %v450, %v770
        %v772 = vpop.f32.mrf.mxu0
        %v773 = vadd.f32 %v450, %v772
        %v774 = vpop.f32.mrf.mxu0
        %v775 = vadd.f32 %v455, %v774
        %v776 = vpop.f32.mrf.mxu0
        %v777 = vadd.f32 %v455, %v776
        %778 = vmatprep.mubr.bf16.mxu0 0
        %779 = vmatmul.mubr.bf16.gmra.mxu0 %v643
        %v780 = vpop.f32.mrf.mxu0
        %v781 = vadd.f32 %v460, %v780
        %v782 = vpop.f32.mrf.mxu0
        %v783 = vadd.f32 %v460, %v782
        %v784 = vpop.f32.mrf.mxu0
        %v785 = vadd.f32 %v465, %v784
        %v786 = vpop.f32.mrf.mxu0
        %v787 = vadd.f32 %v465, %v786
        %788 = vmatprep.mubr.bf16.mxu0 0
        %789 = vmatmul.mubr.bf16.gmra.mxu0 %v646
        %v790 = vpop.f32.mrf.mxu0
        %v791 = vadd.f32 %v470, %v790
        %v792 = vpop.f32.mrf.mxu0
        %v793 = vadd.f32 %v470, %v792
        %v794 = vpop.f32.mrf.mxu0
        %v795 = vadd.f32 %v475, %v794
        %v796 = vpop.f32.mrf.mxu0
        %v797 = vadd.f32 %v475, %v796
        %798 = vmatprep.mubr.bf16.mxu0 0
        %799 = vmatmul.mubr.bf16.gmra.mxu0 %v649
        %v800 = vpop.f32.mrf.mxu0
        %v801 = vadd.f32 %v480, %v800
        %v802 = vpop.f32.mrf.mxu0
        %v803 = vadd.f32 %v480, %v802
        %v804 = vpop.f32.mrf.mxu0
        %v805 = vadd.f32 %v485, %v804
        %v806 = vpop.f32.mrf.mxu0
        %v807 = vadd.f32 %v485, %v806
        %808 = vmatprep.mubr.bf16.mxu0 0
        %809 = vmatmul.mubr.bf16.gmra.mxu0 %v652
        %v810 = vpop.f32.mrf.mxu0
        %v811 = vadd.f32 %v490, %v810
        %v812 = vpop.f32.mrf.mxu0
        %v813 = vadd.f32 %v490, %v812
        %v814 = vpop.f32.mrf.mxu0
        %v815 = vadd.f32 %v495, %v814
        %v816 = vpop.f32.mrf.mxu0
        %v817 = vadd.f32 %v495, %v816
        %818 = vmatprep.mubr.bf16.mxu0 0
        %819 = vmatmul.mubr.bf16.gmra.mxu0 %v655
        %v820 = vpop.f32.mrf.mxu0
        %v821 = vadd.f32 %v500, %v820
        %v822 = vpop.f32.mrf.mxu0
        %v823 = vadd.f32 %v500, %v822
        %v824 = vpop.f32.mrf.mxu0
        %v825 = vadd.f32 %v505, %v824
        %v826 = vpop.f32.mrf.mxu0
        %v827 = vadd.f32 %v505, %v826
        %828 = vmatprep.mubr.bf16.mxu0 0
        %829 = vmatmul.mubr.bf16.gmra.mxu0 %v658
        %v830 = vpop.f32.mrf.mxu0
        %v831 = vadd.f32 %v510, %v830
        %v832 = vpop.f32.mrf.mxu0
        %v833 = vadd.f32 %v510, %v832
        %v834 = vpop.f32.mrf.mxu0
        %v835 = vadd.f32 %v515, %v834
        %v836 = vpop.f32.mrf.mxu0
        %v837 = vadd.f32 %v515, %v836
        %838 = vmatprep.mubr.bf16.mxu0 0
        %839 = vmatmul.mubr.bf16.gmra.mxu0 %v661
        %v840 = vpop.f32.mrf.mxu0
        %v841 = vadd.f32 %v520, %v840
        %v842 = vpop.f32.mrf.mxu0
        %v843 = vadd.f32 %v520, %v842
        %v844 = vpop.f32.mrf.mxu0
        %v845 = vadd.f32 %v525, %v844
        %v846 = vpop.f32.mrf.mxu0
        %v847 = vadd.f32 %v525, %v846
        %848 = vmatprep.mubr.bf16.mxu0 0
        %849 = vmatmul.mubr.bf16.gmra.mxu0 %v664
        %v850 = vpop.f32.mrf.mxu0
        %v851 = vadd.f32 %v530, %v850
        %v852 = vpop.f32.mrf.mxu0
        %v853 = vadd.f32 %v530, %v852
        %v854 = vpop.f32.mrf.mxu0
        %v855 = vadd.f32 %v535, %v854
        %v856 = vpop.f32.mrf.mxu0
        %v857 = vadd.f32 %v535, %v856
        %858 = vdwg.mxu0
        %v859 = vmax.f32 %v701, 0.0
        %v860 = vmax.f32 %v703, 0.0
        %v861 = vmax.f32 %v705, 0.0
        %v862 = vmax.f32 %v707, 0.0
        %v863 = vmax.f32 %v711, 0.0
        %v864 = vmax.f32 %v713, 0.0
        %v865 = vmax.f32 %v715, 0.0
        %v866 = vmax.f32 %v717, 0.0
        %v867 = vmax.f32 %v721, 0.0
        %v868 = vmax.f32 %v723, 0.0
        %v869 = vmax.f32 %v725, 0.0
        %v870 = vmax.f32 %v727, 0.0
        %v871 = vmax.f32 %v731, 0.0
        %v872 = vmax.f32 %v733, 0.0
        %v873 = vmax.f32 %v735, 0.0
        %v874 = vmax.f32 %v737, 0.0
        %v875 = vmax.f32 %v741, 0.0
        %v876 = vmax.f32 %v743, 0.0
        %v877 = vmax.f32 %v745, 0.0
        %v878 = vmax.f32 %v747, 0.0
        %v879 = vmax.f32 %v751, 0.0
        %v880 = vmax.f32 %v753, 0.0
        %v881 = vmax.f32 %v755, 0.0
        %v882 = vmax.f32 %v757, 0.0
        %v883 = vmax.f32 %v761, 0.0
        %v884 = vmax.f32 %v763, 0.0
        %v885 = vmax.f32 %v765, 0.0
        %v886 = vmax.f32 %v767, 0.0
        %v887 = vmax.f32 %v771, 0.0
        %v888 = vmax.f32 %v773, 0.0
        %v889 = vmax.f32 %v775, 0.0
        %v890 = vmax.f32 %v777, 0.0
        %v891 = vmax.f32 %v781, 0.0
        %v892 = vmax.f32 %v783, 0.0
        %v893 = vmax.f32 %v785, 0.0
        %v894 = vmax.f32 %v787, 0.0
        %v895 = vmax.f32 %v791, 0.0
        %v896 = vmax.f32 %v793, 0.0
        %v897 = vmax.f32 %v795, 0.0
        %v898 = vmax.f32 %v797, 0.0
        %v899 = vmax.f32 %v801, 0.0
        %v900 = vmax.f32 %v803, 0.0
        %v901 = vmax.f32 %v805, 0.0
        %v902 = vmax.f32 %v807, 0.0
        %v903 = vmax.f32 %v811, 0.0
        %v904 = vmax.f32 %v813, 0.0
        %v905 = vmax.f32 %v815, 0.0
        %v906 = vmax.f32 %v817, 0.0
        %v907 = vmax.f32 %v821, 0.0
        %v908 = vmax.f32 %v823, 0.0
        %v909 = vmax.f32 %v825, 0.0
        %v910 = vmax.f32 %v827, 0.0
        %v911 = vmax.f32 %v831, 0.0
        %v912 = vmax.f32 %v833, 0.0
        %v913 = vmax.f32 %v835, 0.0
        %v914 = vmax.f32 %v837, 0.0
        %v915 = vmax.f32 %v841, 0.0
        %v916 = vmax.f32 %v843, 0.0
        %v917 = vmax.f32 %v845, 0.0
        %v918 = vmax.f32 %v847, 0.0
        %v919 = vmax.f32 %v851, 0.0
        %v920 = vmax.f32 %v853, 0.0
        %v921 = vmax.f32 %v855, 0.0
        %v922 = vmax.f32 %v857, 0.0
        %v923 = vpack.c.bf16 %v861, %v859
        %v924 = vpack.c.bf16 %v862, %v860
        %v925 = vpack.c.bf16 %v865, %v863
        %v926 = vpack.c.bf16 %v866, %v864
        %v927 = vpack.c.bf16 %v869, %v867
        %v928 = vpack.c.bf16 %v870, %v868
        %v929 = vpack.c.bf16 %v873, %v871
        %v930 = vpack.c.bf16 %v874, %v872
        %v931 = vpack.c.bf16 %v877, %v875
        %v932 = vpack.c.bf16 %v878, %v876
        %v933 = vpack.c.bf16 %v881, %v879
        %v934 = vpack.c.bf16 %v882, %v880
        %v935 = vpack.c.bf16 %v885, %v883
        %v936 = vpack.c.bf16 %v886, %v884
        %v937 = vpack.c.bf16 %v889, %v887
        %v938 = vpack.c.bf16 %v890, %v888
        %v939 = vpack.c.bf16 %v893, %v891
        %v940 = vpack.c.bf16 %v894, %v892
        %v941 = vpack.c.bf16 %v897, %v895
        %v942 = vpack.c.bf16 %v898, %v896
        %v943 = vpack.c.bf16 %v901, %v899
        %v944 = vpack.c.bf16 %v902, %v900
        %v945 = vpack.c.bf16 %v905, %v903
        %v946 = vpack.c.bf16 %v906, %v904
        %v947 = vpack.c.bf16 %v909, %v907
        %v948 = vpack.c.bf16 %v910, %v908
        %v949 = vpack.c.bf16 %v913, %v911
        %v950 = vpack.c.bf16 %v914, %v912
        %v951 = vpack.c.bf16 %v917, %v915
        %v952 = vpack.c.bf16 %v918, %v916
        %v953 = vpack.c.bf16 %v921, %v919
        %v954 = vpack.c.bf16 %v922, %v920
        %v955 = vld [vmem:[%s3] sm:$0xff]
        %v956 = vld [vmem:[%s3 + $0x8] sm:$0xff]
        %v957 = vld [vmem:[%s3 + $0x10] sm:$0xff]
        %v958 = vld [vmem:[%s3 + $0x18] sm:$0xff]
        %v959 = vld [vmem:[%s3 + $0x20] sm:$0xff]
        %v960 = vld [vmem:[%s3 + $0x28] sm:$0xff]
        %v961 = vld [vmem:[%s3 + $0x30] sm:$0xff]
        %v962 = vld [vmem:[%s3 + $0x38] sm:$0xff]
        %v963 = vld [vmem:[%s3 + $0x40] sm:$0xff]
        %v964 = vld [vmem:[%s3 + $0x48] sm:$0xff]
        %v965 = vld [vmem:[%s3 + $0x50] sm:$0xff]
        %v966 = vld [vmem:[%s3 + $0x58] sm:$0xff]
        %v967 = vld [vmem:[%s3 + $0x60] sm:$0xff]
        %v968 = vld [vmem:[%s3 + $0x68] sm:$0xff]
        %v969 = vld [vmem:[%s3 + $0x70] sm:$0xff]
        %v970 = vld [vmem:[%s3 + $0x78] sm:$0xff]
        %v971 = vld [vmem:[%s3 + $0x80] sm:$0xff]
        %v972 = vld [vmem:[%s3 + $0x88] sm:$0xff]
        %v973 = vld [vmem:[%s3 + $0x90] sm:$0xff]
        %v974 = vld [vmem:[%s3 + $0x98] sm:$0xff]
        %v975 = vld [vmem:[%s3 + $0xa0] sm:$0xff]
        %v976 = vld [vmem:[%s3 + $0xa8] sm:$0xff]
        %v977 = vld [vmem:[%s3 + $0xb0] sm:$0xff]
        %v978 = vld [vmem:[%s3 + $0xb8] sm:$0xff]
        %v979 = vld [vmem:[%s3 + $0xc0] sm:$0xff]
        %v980 = vld [vmem:[%s3 + $0xc8] sm:$0xff]
        %v981 = vld [vmem:[%s3 + $0xd0] sm:$0xff]
        %v982 = vld [vmem:[%s3 + $0xd8] sm:$0xff]
        %v983 = vld [vmem:[%s3 + $0xe0] sm:$0xff]
        %v984 = vld [vmem:[%s3 + $0xe8] sm:$0xff]
        %v985 = vld [vmem:[%s3 + $0xf0] sm:$0xff]
        %v986 = vld [vmem:[%s3 + $0xf8] sm:$0xff]
        %v987 = vld [vmem:[%s4] sm:$0xff]
        %v988 = vld [vmem:[%s4 + $0x8] sm:$0xff]
        %v989 = vld [vmem:[%s4 + $0x10] sm:$0xff]
        %v990 = vld [vmem:[%s4 + $0x18] sm:$0xff]
        %v991 = vld [vmem:[%s4 + $0x20] sm:$0xff]
        %v992 = vld [vmem:[%s4 + $0x28] sm:$0xff]
        %v993 = vld [vmem:[%s4 + $0x30] sm:$0xff]
        %v994 = vld [vmem:[%s4 + $0x38] sm:$0xff]
        %v995 = vld [vmem:[%s4 + $0x40] sm:$0xff]
        %v996 = vld [vmem:[%s4 + $0x48] sm:$0xff]
        %v997 = vld [vmem:[%s4 + $0x50] sm:$0xff]
        %v998 = vld [vmem:[%s4 + $0x58] sm:$0xff]
        %v999 = vld [vmem:[%s4 + $0x60] sm:$0xff]
        %v1000 = vld [vmem:[%s4 + $0x68] sm:$0xff]
        %v1001 = vld [vmem:[%s4 + $0x70] sm:$0xff]
        %v1002 = vld [vmem:[%s4 + $0x78] sm:$0xff]
        %v1003 = vld [vmem:[%s4 + $0x80] sm:$0xff]
        %v1004 = vld [vmem:[%s4 + $0x88] sm:$0xff]
        %v1005 = vld [vmem:[%s4 + $0x90] sm:$0xff]
        %v1006 = vld [vmem:[%s4 + $0x98] sm:$0xff]
        %v1007 = vld [vmem:[%s4 + $0xa0] sm:$0xff]
        %v1008 = vld [vmem:[%s4 + $0xa8] sm:$0xff]
        %v1009 = vld [vmem:[%s4 + $0xb0] sm:$0xff]
        %v1010 = vld [vmem:[%s4 + $0xb8] sm:$0xff]
        %v1011 = vld [vmem:[%s4 + $0xc0] sm:$0xff]
        %v1012 = vld [vmem:[%s4 + $0xc8] sm:$0xff]
        %v1013 = vld [vmem:[%s4 + $0xd0] sm:$0xff]
        %v1014 = vld [vmem:[%s4 + $0xd8] sm:$0xff]
        %v1015 = vld [vmem:[%s4 + $0xe0] sm:$0xff]
        %v1016 = vld [vmem:[%s4 + $0xe8] sm:$0xff]
        %v1017 = vld [vmem:[%s4 + $0xf0] sm:$0xff]
        %v1018 = vld [vmem:[%s4 + $0xf8] sm:$0xff]
        %1020 = vset.pattern.permute.xlu0 0
        %1021 = vperm.xlu0 %1020, %v987
        %v1022 = vpop.permute.xlu0 %1021
        %1025 = vset.pattern.permute.xlu0 0
        %1026 = vperm.xlu0 %1025, %v988
        %v1027 = vpop.permute.xlu0 %1026
        %1030 = vset.pattern.permute.xlu0 0
        %1031 = vperm.xlu0 %1030, %v989
        %v1032 = vpop.permute.xlu0 %1031
        %1035 = vset.pattern.permute.xlu0 0
        %1036 = vperm.xlu0 %1035, %v990
        %v1037 = vpop.permute.xlu0 %1036
        %1040 = vset.pattern.permute.xlu0 0
        %1041 = vperm.xlu0 %1040, %v991
        %v1042 = vpop.permute.xlu0 %1041
        %1045 = vset.pattern.permute.xlu0 0
        %1046 = vperm.xlu0 %1045, %v992
        %v1047 = vpop.permute.xlu0 %1046
        %1050 = vset.pattern.permute.xlu0 0
        %1051 = vperm.xlu0 %1050, %v993
        %v1052 = vpop.permute.xlu0 %1051
        %1055 = vset.pattern.permute.xlu0 0
        %1056 = vperm.xlu0 %1055, %v994
        %v1057 = vpop.permute.xlu0 %1056
        %1060 = vset.pattern.permute.xlu0 0
        %1061 = vperm.xlu0 %1060, %v995
        %v1062 = vpop.permute.xlu0 %1061
        %1065 = vset.pattern.permute.xlu0 0
        %1066 = vperm.xlu0 %1065, %v996
        %v1067 = vpop.permute.xlu0 %1066
        %1070 = vset.pattern.permute.xlu0 0
        %1071 = vperm.xlu0 %1070, %v997
        %v1072 = vpop.permute.xlu0 %1071
        %1075 = vset.pattern.permute.xlu0 0
        %1076 = vperm.xlu0 %1075, %v998
        %v1077 = vpop.permute.xlu0 %1076
        %1080 = vset.pattern.permute.xlu0 0
        %1081 = vperm.xlu0 %1080, %v999
        %v1082 = vpop.permute.xlu0 %1081
        %1085 = vset.pattern.permute.xlu0 0
        %1086 = vperm.xlu0 %1085, %v1000
        %v1087 = vpop.permute.xlu0 %1086
        %1090 = vset.pattern.permute.xlu0 0
        %1091 = vperm.xlu0 %1090, %v1001
        %v1092 = vpop.permute.xlu0 %1091
        %1095 = vset.pattern.permute.xlu0 0
        %1096 = vperm.xlu0 %1095, %v1002
        %v1097 = vpop.permute.xlu0 %1096
        %1100 = vset.pattern.permute.xlu0 0
        %1101 = vperm.xlu0 %1100, %v1003
        %v1102 = vpop.permute.xlu0 %1101
        %1105 = vset.pattern.permute.xlu0 0
        %1106 = vperm.xlu0 %1105, %v1004
        %v1107 = vpop.permute.xlu0 %1106
        %1110 = vset.pattern.permute.xlu0 0
        %1111 = vperm.xlu0 %1110, %v1005
        %v1112 = vpop.permute.xlu0 %1111
        %1115 = vset.pattern.permute.xlu0 0
        %1116 = vperm.xlu0 %1115, %v1006
        %v1117 = vpop.permute.xlu0 %1116
        %1120 = vset.pattern.permute.xlu0 0
        %1121 = vperm.xlu0 %1120, %v1007
        %v1122 = vpop.permute.xlu0 %1121
        %1125 = vset.pattern.permute.xlu0 0
        %1126 = vperm.xlu0 %1125, %v1008
        %v1127 = vpop.permute.xlu0 %1126
        %1130 = vset.pattern.permute.xlu0 0
        %1131 = vperm.xlu0 %1130, %v1009
        %v1132 = vpop.permute.xlu0 %1131
        %1135 = vset.pattern.permute.xlu0 0
        %1136 = vperm.xlu0 %1135, %v1010
        %v1137 = vpop.permute.xlu0 %1136
        %1140 = vset.pattern.permute.xlu0 0
        %1141 = vperm.xlu0 %1140, %v1011
        %v1142 = vpop.permute.xlu0 %1141
        %1145 = vset.pattern.permute.xlu0 0
        %1146 = vperm.xlu0 %1145, %v1012
        %v1147 = vpop.permute.xlu0 %1146
        %1150 = vset.pattern.permute.xlu0 0
        %1151 = vperm.xlu0 %1150, %v1013
        %v1152 = vpop.permute.xlu0 %1151
        %1155 = vset.pattern.permute.xlu0 0
        %1156 = vperm.xlu0 %1155, %v1014
        %v1157 = vpop.permute.xlu0 %1156
        %1160 = vset.pattern.permute.xlu0 0
        %1161 = vperm.xlu0 %1160, %v1015
        %v1162 = vpop.permute.xlu0 %1161
        %1165 = vset.pattern.permute.xlu0 0
        %1166 = vperm.xlu0 %1165, %v1016
        %v1167 = vpop.permute.xlu0 %1166
        %1170 = vset.pattern.permute.xlu0 0
        %1171 = vperm.xlu0 %1170, %v1017
        %v1172 = vpop.permute.xlu0 %1171
        %1175 = vset.pattern.permute.xlu0 0
        %1176 = vperm.xlu0 %1175, %v1018
        %v1177 = vpop.permute.xlu0 %1176
        %v1211 = vunpack.c.l.b16 %v955
        %v1212 = vunpack.c.h.b16 %v955
        %v1213 = vunpack.c.l.b16 %v956
        %v1214 = vunpack.c.h.b16 %v956
        %v1215 = vunpack.c.l.b16 %v957
        %v1216 = vunpack.c.h.b16 %v957
        %v1217 = vunpack.c.l.b16 %v958
        %v1218 = vunpack.c.h.b16 %v958
        %v1219 = vunpack.c.l.b16 %v959
        %v1220 = vunpack.c.h.b16 %v959
        %v1221 = vunpack.c.l.b16 %v960
        %v1222 = vunpack.c.h.b16 %v960
        %v1223 = vunpack.c.l.b16 %v961
        %v1224 = vunpack.c.h.b16 %v961
        %v1225 = vunpack.c.l.b16 %v962
        %v1226 = vunpack.c.h.b16 %v962
        %v1227 = vunpack.c.l.b16 %v963
        %v1228 = vunpack.c.h.b16 %v963
        %v1229 = vunpack.c.l.b16 %v964
        %v1230 = vunpack.c.h.b16 %v964
        %v1231 = vunpack.c.l.b16 %v965
        %v1232 = vunpack.c.h.b16 %v965
        %v1233 = vunpack.c.l.b16 %v966
        %v1234 = vunpack.c.h.b16 %v966
        %v1235 = vunpack.c.l.b16 %v967
        %v1236 = vunpack.c.h.b16 %v967
        %v1237 = vunpack.c.l.b16 %v968
        %v1238 = vunpack.c.h.b16 %v968
        %v1239 = vunpack.c.l.b16 %v969
        %v1240 = vunpack.c.h.b16 %v969
        %v1241 = vunpack.c.l.b16 %v970
        %v1242 = vunpack.c.h.b16 %v970
        %v1243 = vunpack.c.l.b16 %v971
        %v1244 = vunpack.c.h.b16 %v971
        %v1245 = vunpack.c.l.b16 %v972
        %v1246 = vunpack.c.h.b16 %v972
        %v1247 = vunpack.c.l.b16 %v973
        %v1248 = vunpack.c.h.b16 %v973
        %v1249 = vunpack.c.l.b16 %v974
        %v1250 = vunpack.c.h.b16 %v974
        %v1251 = vunpack.c.l.b16 %v975
        %v1252 = vunpack.c.h.b16 %v975
        %v1253 = vunpack.c.l.b16 %v976
        %v1254 = vunpack.c.h.b16 %v976
        %v1255 = vunpack.c.l.b16 %v977
        %v1256 = vunpack.c.h.b16 %v977
        %v1257 = vunpack.c.l.b16 %v978
        %v1258 = vunpack.c.h.b16 %v978
        %v1259 = vunpack.c.l.b16 %v979
        %v1260 = vunpack.c.h.b16 %v979
        %v1261 = vunpack.c.l.b16 %v980
        %v1262 = vunpack.c.h.b16 %v980
        %v1263 = vunpack.c.l.b16 %v981
        %v1264 = vunpack.c.h.b16 %v981
        %v1265 = vunpack.c.l.b16 %v982
        %v1266 = vunpack.c.h.b16 %v982
        %v1267 = vunpack.c.l.b16 %v983
        %v1268 = vunpack.c.h.b16 %v983
        %v1269 = vunpack.c.l.b16 %v984
        %v1270 = vunpack.c.h.b16 %v984
        %v1271 = vunpack.c.l.b16 %v985
        %v1272 = vunpack.c.h.b16 %v985
        %v1273 = vunpack.c.l.b16 %v986
        %v1274 = vunpack.c.h.b16 %v986
        %v1275 = vpack.c.b16 %v1213, %v1211
        %v1276 = vpack.c.b16 %v1214, %v1212
        %v1277 = vpack.c.b16 %v1217, %v1215
        %v1278 = vpack.c.b16 %v1218, %v1216
        %v1279 = vpack.c.b16 %v1221, %v1219
        %v1280 = vpack.c.b16 %v1222, %v1220
        %v1281 = vpack.c.b16 %v1225, %v1223
        %v1282 = vpack.c.b16 %v1226, %v1224
        %v1283 = vpack.c.b16 %v1229, %v1227
        %v1284 = vpack.c.b16 %v1230, %v1228
        %v1285 = vpack.c.b16 %v1233, %v1231
        %v1286 = vpack.c.b16 %v1234, %v1232
        %v1287 = vpack.c.b16 %v1237, %v1235
        %v1288 = vpack.c.b16 %v1238, %v1236
        %v1289 = vpack.c.b16 %v1241, %v1239
        %v1290 = vpack.c.b16 %v1242, %v1240
        %v1291 = vpack.c.b16 %v1245, %v1243
        %v1292 = vpack.c.b16 %v1246, %v1244
        %v1293 = vpack.c.b16 %v1249, %v1247
        %v1294 = vpack.c.b16 %v1250, %v1248
        %v1295 = vpack.c.b16 %v1253, %v1251
        %v1296 = vpack.c.b16 %v1254, %v1252
        %v1297 = vpack.c.b16 %v1257, %v1255
        %v1298 = vpack.c.b16 %v1258, %v1256
        %v1299 = vpack.c.b16 %v1261, %v1259
        %v1300 = vpack.c.b16 %v1262, %v1260
        %v1301 = vpack.c.b16 %v1265, %v1263
        %v1302 = vpack.c.b16 %v1266, %v1264
        %v1303 = vpack.c.b16 %v1269, %v1267
        %v1304 = vpack.c.b16 %v1270, %v1268
        %v1305 = vpack.c.b16 %v1273, %v1271
        %v1306 = vpack.c.b16 %v1274, %v1272
        %1339 = vmatprep.subr.bf16.mxu0 %v938
        %1340 = vmatpush1.bf16.msra.mxu0 %v937
        %1341 = vmatprep.subr.bf16.mxu0 %v936
        %1342 = vmatpush1.bf16.msra.mxu0 %v935
        %1343 = vmatprep.subr.bf16.mxu0 %v934
        %1344 = vmatpush1.bf16.msra.mxu0 %v933
        %1345 = vmatprep.subr.bf16.mxu0 %v932
        %1346 = vmatpush1.bf16.msra.mxu0 %v931
        %1347 = vmatprep.subr.bf16.mxu0 %v930
        %1348 = vmatpush1.bf16.msra.mxu0 %v929
        %1349 = vmatprep.subr.bf16.mxu0 %v928
        %1350 = vmatpush1.bf16.msra.mxu0 %v927
        %1351 = vmatprep.subr.bf16.mxu0 %v926
        %1352 = vmatpush1.bf16.msra.mxu0 %v925
        %1353 = vmatprep.subr.bf16.mxu0 %v924
        %1354 = vmatpush1.bf16.msra.mxu0 %v923
        %1355 = vmatprep.subr.bf16.mxu0 %v954
        %1356 = vmatpush2.bf16.msra.mxu0 %v953
        %1357 = vmatprep.subr.bf16.mxu0 %v952
        %1358 = vmatpush2.bf16.msra.mxu0 %v951
        %1359 = vmatprep.subr.bf16.mxu0 %v950
        %1360 = vmatpush2.bf16.msra.mxu0 %v949
        %1361 = vmatprep.subr.bf16.mxu0 %v948
        %1362 = vmatpush2.bf16.msra.mxu0 %v947
        %1363 = vmatprep.subr.bf16.mxu0 %v946
        %1364 = vmatpush2.bf16.msra.mxu0 %v945
        %1365 = vmatprep.subr.bf16.mxu0 %v944
        %1366 = vmatpush2.bf16.msra.mxu0 %v943
        %1367 = vmatprep.subr.bf16.mxu0 %v942
        %1368 = vmatpush2.bf16.msra.mxu0 %v941
        %1369 = vmatprep.subr.bf16.mxu0 %v940
        %1370 = vmatpush2.bf16.msra.mxu0 %v939
        %1371 = vmatprep.mubr.bf16.mxu0 %v1276
        %1372 = vmatmul.mubr.bf16.gmra.mxu0 %v1275
        %v1373 = vpop.f32.mrf.mxu0
        %v1374 = vadd.f32 %v1022, %v1373
        %v1375 = vpop.f32.mrf.mxu0
        %v1376 = vadd.f32 %v1022, %v1375
        %v1377 = vpop.f32.mrf.mxu0
        %v1378 = vadd.f32 %v1027, %v1377
        %v1379 = vpop.f32.mrf.mxu0
        %v1380 = vadd.f32 %v1027, %v1379
        %1381 = vmatprep.mubr.bf16.mxu0 %v1278
        %1382 = vmatmul.mubr.bf16.gmra.mxu0 %v1277
        %v1383 = vpop.f32.mrf.mxu0
        %v1384 = vadd.f32 %v1032, %v1383
        %v1385 = vpop.f32.mrf.mxu0
        %v1386 = vadd.f32 %v1032, %v1385
        %v1387 = vpop.f32.mrf.mxu0
        %v1388 = vadd.f32 %v1037, %v1387
        %v1389 = vpop.f32.mrf.mxu0
        %v1390 = vadd.f32 %v1037, %v1389
        %1391 = vmatprep.mubr.bf16.mxu0 %v1280
        %1392 = vmatmul.mubr.bf16.gmra.mxu0 %v1279
        %v1393 = vpop.f32.mrf.mxu0
        %v1394 = vadd.f32 %v1042, %v1393
        %v1395 = vpop.f32.mrf.mxu0
        %v1396 = vadd.f32 %v1042, %v1395
        %v1397 = vpop.f32.mrf.mxu0
        %v1398 = vadd.f32 %v1047, %v1397
        %v1399 = vpop.f32.mrf.mxu0
        %v1400 = vadd.f32 %v1047, %v1399
        %1401 = vmatprep.mubr.bf16.mxu0 %v1282
        %1402 = vmatmul.mubr.bf16.gmra.mxu0 %v1281
        %v1403 = vpop.f32.mrf.mxu0
        %v1404 = vadd.f32 %v1052, %v1403
        %v1405 = vpop.f32.mrf.mxu0
        %v1406 = vadd.f32 %v1052, %v1405
        %v1407 = vpop.f32.mrf.mxu0
        %v1408 = vadd.f32 %v1057, %v1407
        %v1409 = vpop.f32.mrf.mxu0
        %v1410 = vadd.f32 %v1057, %v1409
        %1411 = vmatprep.mubr.bf16.mxu0 %v1284
        %1412 = vmatmul.mubr.bf16.gmra.mxu0 %v1283
        %v1413 = vpop.f32.mrf.mxu0
        %v1414 = vadd.f32 %v1062, %v1413
        %v1415 = vpop.f32.mrf.mxu0
        %v1416 = vadd.f32 %v1062, %v1415
        %v1417 = vpop.f32.mrf.mxu0
        %v1418 = vadd.f32 %v1067, %v1417
        %v1419 = vpop.f32.mrf.mxu0
        %v1420 = vadd.f32 %v1067, %v1419
        %1421 = vmatprep.mubr.bf16.mxu0 %v1286
        %1422 = vmatmul.mubr.bf16.gmra.mxu0 %v1285
        %v1423 = vpop.f32.mrf.mxu0
        %v1424 = vadd.f32 %v1072, %v1423
        %v1425 = vpop.f32.mrf.mxu0
        %v1426 = vadd.f32 %v1072, %v1425
        %v1427 = vpop.f32.mrf.mxu0
        %v1428 = vadd.f32 %v1077, %v1427
        %v1429 = vpop.f32.mrf.mxu0
        %v1430 = vadd.f32 %v1077, %v1429
        %1431 = vmatprep.mubr.bf16.mxu0 %v1288
        %1432 = vmatmul.mubr.bf16.gmra.mxu0 %v1287
        %v1433 = vpop.f32.mrf.mxu0
        %v1434 = vadd.f32 %v1082, %v1433
        %v1435 = vpop.f32.mrf.mxu0
        %v1436 = vadd.f32 %v1082, %v1435
        %v1437 = vpop.f32.mrf.mxu0
        %v1438 = vadd.f32 %v1087, %v1437
        %v1439 = vpop.f32.mrf.mxu0
        %v1440 = vadd.f32 %v1087, %v1439
        %1441 = vmatprep.mubr.bf16.mxu0 %v1290
        %1442 = vmatmul.mubr.bf16.gmra.mxu0 %v1289
        %v1443 = vpop.f32.mrf.mxu0
        %v1444 = vadd.f32 %v1092, %v1443
        %v1445 = vpop.f32.mrf.mxu0
        %v1446 = vadd.f32 %v1092, %v1445
        %v1447 = vpop.f32.mrf.mxu0
        %v1448 = vadd.f32 %v1097, %v1447
        %v1449 = vpop.f32.mrf.mxu0
        %v1450 = vadd.f32 %v1097, %v1449
        %1451 = vmatprep.mubr.bf16.mxu0 %v1292
        %1452 = vmatmul.mubr.bf16.gmra.mxu0 %v1291
        %v1453 = vpop.f32.mrf.mxu0
        %v1454 = vadd.f32 %v1102, %v1453
        %v1455 = vpop.f32.mrf.mxu0
        %v1456 = vadd.f32 %v1102, %v1455
        %v1457 = vpop.f32.mrf.mxu0
        %v1458 = vadd.f32 %v1107, %v1457
        %v1459 = vpop.f32.mrf.mxu0
        %v1460 = vadd.f32 %v1107, %v1459
        %1461 = vmatprep.mubr.bf16.mxu0 %v1294
        %1462 = vmatmul.mubr.bf16.gmra.mxu0 %v1293
        %v1463 = vpop.f32.mrf.mxu0
        %v1464 = vadd.f32 %v1112, %v1463
        %v1465 = vpop.f32.mrf.mxu0
        %v1466 = vadd.f32 %v1112, %v1465
        %v1467 = vpop.f32.mrf.mxu0
        %v1468 = vadd.f32 %v1117, %v1467
        %v1469 = vpop.f32.mrf.mxu0
        %v1470 = vadd.f32 %v1117, %v1469
        %1471 = vmatprep.mubr.bf16.mxu0 %v1296
        %1472 = vmatmul.mubr.bf16.gmra.mxu0 %v1295
        %v1473 = vpop.f32.mrf.mxu0
        %v1474 = vadd.f32 %v1122, %v1473
        %v1475 = vpop.f32.mrf.mxu0
        %v1476 = vadd.f32 %v1122, %v1475
        %v1477 = vpop.f32.mrf.mxu0
        %v1478 = vadd.f32 %v1127, %v1477
        %v1479 = vpop.f32.mrf.mxu0
        %v1480 = vadd.f32 %v1127, %v1479
        %1481 = vmatprep.mubr.bf16.mxu0 %v1298
        %1482 = vmatmul.mubr.bf16.gmra.mxu0 %v1297
        %v1483 = vpop.f32.mrf.mxu0
        %v1484 = vadd.f32 %v1132, %v1483
        %v1485 = vpop.f32.mrf.mxu0
        %v1486 = vadd.f32 %v1132, %v1485
        %v1487 = vpop.f32.mrf.mxu0
        %v1488 = vadd.f32 %v1137, %v1487
        %v1489 = vpop.f32.mrf.mxu0
        %v1490 = vadd.f32 %v1137, %v1489
        %1491 = vmatprep.mubr.bf16.mxu0 %v1300
        %1492 = vmatmul.mubr.bf16.gmra.mxu0 %v1299
        %v1493 = vpop.f32.mrf.mxu0
        %v1494 = vadd.f32 %v1142, %v1493
        %v1495 = vpop.f32.mrf.mxu0
        %v1496 = vadd.f32 %v1142, %v1495
        %v1497 = vpop.f32.mrf.mxu0
        %v1498 = vadd.f32 %v1147, %v1497
        %v1499 = vpop.f32.mrf.mxu0
        %v1500 = vadd.f32 %v1147, %v1499
        %1501 = vmatprep.mubr.bf16.mxu0 %v1302
        %1502 = vmatmul.mubr.bf16.gmra.mxu0 %v1301
        %v1503 = vpop.f32.mrf.mxu0
        %v1504 = vadd.f32 %v1152, %v1503
        %v1505 = vpop.f32.mrf.mxu0
        %v1506 = vadd.f32 %v1152, %v1505
        %v1507 = vpop.f32.mrf.mxu0
        %v1508 = vadd.f32 %v1157, %v1507
        %v1509 = vpop.f32.mrf.mxu0
        %v1510 = vadd.f32 %v1157, %v1509
        %1511 = vmatprep.mubr.bf16.mxu0 %v1304
        %1512 = vmatmul.mubr.bf16.gmra.mxu0 %v1303
        %v1513 = vpop.f32.mrf.mxu0
        %v1514 = vadd.f32 %v1162, %v1513
        %v1515 = vpop.f32.mrf.mxu0
        %v1516 = vadd.f32 %v1162, %v1515
        %v1517 = vpop.f32.mrf.mxu0
        %v1518 = vadd.f32 %v1167, %v1517
        %v1519 = vpop.f32.mrf.mxu0
        %v1520 = vadd.f32 %v1167, %v1519
        %1521 = vmatprep.mubr.bf16.mxu0 %v1306
        %1522 = vmatmul.mubr.bf16.gmra.mxu0 %v1305
        %v1523 = vpop.f32.mrf.mxu0
        %v1524 = vadd.f32 %v1172, %v1523
        %v1525 = vpop.f32.mrf.mxu0
        %v1526 = vadd.f32 %v1172, %v1525
        %v1527 = vpop.f32.mrf.mxu0
        %v1528 = vadd.f32 %v1177, %v1527
        %v1529 = vpop.f32.mrf.mxu0
        %v1530 = vadd.f32 %v1177, %v1529
        %1531 = vdwg.mxu0
        %v1532 = vmax.f32 %v1374, 0.0
        %v1533 = vmax.f32 %v1376, 0.0
        %v1534 = vmax.f32 %v1378, 0.0
        %v1535 = vmax.f32 %v1380, 0.0
        %v1536 = vmax.f32 %v1384, 0.0
        %v1537 = vmax.f32 %v1386, 0.0
        %v1538 = vmax.f32 %v1388, 0.0
        %v1539 = vmax.f32 %v1390, 0.0
        %v1540 = vmax.f32 %v1394, 0.0
        %v1541 = vmax.f32 %v1396, 0.0
        %v1542 = vmax.f32 %v1398, 0.0
        %v1543 = vmax.f32 %v1400, 0.0
        %v1544 = vmax.f32 %v1404, 0.0
        %v1545 = vmax.f32 %v1406, 0.0
        %v1546 = vmax.f32 %v1408, 0.0
        %v1547 = vmax.f32 %v1410, 0.0
        %v1548 = vmax.f32 %v1414, 0.0
        %v1549 = vmax.f32 %v1416, 0.0
        %v1550 = vmax.f32 %v1418, 0.0
        %v1551 = vmax.f32 %v1420, 0.0
        %v1552 = vmax.f32 %v1424, 0.0
        %v1553 = vmax.f32 %v1426, 0.0
        %v1554 = vmax.f32 %v1428, 0.0
        %v1555 = vmax.f32 %v1430, 0.0
        %v1556 = vmax.f32 %v1434, 0.0
        %v1557 = vmax.f32 %v1436, 0.0
        %v1558 = vmax.f32 %v1438, 0.0
        %v1559 = vmax.f32 %v1440, 0.0
        %v1560 = vmax.f32 %v1444, 0.0
        %v1561 = vmax.f32 %v1446, 0.0
        %v1562 = vmax.f32 %v1448, 0.0
        %v1563 = vmax.f32 %v1450, 0.0
        %v1564 = vmax.f32 %v1454, 0.0
        %v1565 = vmax.f32 %v1456, 0.0
        %v1566 = vmax.f32 %v1458, 0.0
        %v1567 = vmax.f32 %v1460, 0.0
        %v1568 = vmax.f32 %v1464, 0.0
        %v1569 = vmax.f32 %v1466, 0.0
        %v1570 = vmax.f32 %v1468, 0.0
        %v1571 = vmax.f32 %v1470, 0.0
        %v1572 = vmax.f32 %v1474, 0.0
        %v1573 = vmax.f32 %v1476, 0.0
        %v1574 = vmax.f32 %v1478, 0.0
        %v1575 = vmax.f32 %v1480, 0.0
        %v1576 = vmax.f32 %v1484, 0.0
        %v1577 = vmax.f32 %v1486, 0.0
        %v1578 = vmax.f32 %v1488, 0.0
        %v1579 = vmax.f32 %v1490, 0.0
        %v1580 = vmax.f32 %v1494, 0.0
        %v1581 = vmax.f32 %v1496, 0.0
        %v1582 = vmax.f32 %v1498, 0.0
        %v1583 = vmax.f32 %v1500, 0.0
        %v1584 = vmax.f32 %v1504, 0.0
        %v1585 = vmax.f32 %v1506, 0.0
        %v1586 = vmax.f32 %v1508, 0.0
        %v1587 = vmax.f32 %v1510, 0.0
        %v1588 = vmax.f32 %v1514, 0.0
        %v1589 = vmax.f32 %v1516, 0.0
        %v1590 = vmax.f32 %v1518, 0.0
        %v1591 = vmax.f32 %v1520, 0.0
        %v1592 = vmax.f32 %v1524, 0.0
        %v1593 = vmax.f32 %v1526, 0.0
        %v1594 = vmax.f32 %v1528, 0.0
        %v1595 = vmax.f32 %v1530, 0.0
        %v1596 = vpack.c.bf16 %v1534, %v1532
        %v1597 = vpack.c.bf16 %v1535, %v1533
        %v1598 = vpack.c.bf16 %v1538, %v1536
        %v1599 = vpack.c.bf16 %v1539, %v1537
        %v1600 = vpack.c.bf16 %v1542, %v1540
        %v1601 = vpack.c.bf16 %v1543, %v1541
        %v1602 = vpack.c.bf16 %v1546, %v1544
        %v1603 = vpack.c.bf16 %v1547, %v1545
        %v1604 = vpack.c.bf16 %v1550, %v1548
        %v1605 = vpack.c.bf16 %v1551, %v1549
        %v1606 = vpack.c.bf16 %v1554, %v1552
        %v1607 = vpack.c.bf16 %v1555, %v1553
        %v1608 = vpack.c.bf16 %v1558, %v1556
        %v1609 = vpack.c.bf16 %v1559, %v1557
        %v1610 = vpack.c.bf16 %v1562, %v1560
        %v1611 = vpack.c.bf16 %v1563, %v1561
        %v1612 = vpack.c.bf16 %v1566, %v1564
        %v1613 = vpack.c.bf16 %v1567, %v1565
        %v1614 = vpack.c.bf16 %v1570, %v1568
        %v1615 = vpack.c.bf16 %v1571, %v1569
        %v1616 = vpack.c.bf16 %v1574, %v1572
        %v1617 = vpack.c.bf16 %v1575, %v1573
        %v1618 = vpack.c.bf16 %v1578, %v1576
        %v1619 = vpack.c.bf16 %v1579, %v1577
        %v1620 = vpack.c.bf16 %v1582, %v1580
        %v1621 = vpack.c.bf16 %v1583, %v1581
        %v1622 = vpack.c.bf16 %v1586, %v1584
        %v1623 = vpack.c.bf16 %v1587, %v1585
        %v1624 = vpack.c.bf16 %v1590, %v1588
        %v1625 = vpack.c.bf16 %v1591, %v1589
        %v1626 = vpack.c.bf16 %v1594, %v1592
        %v1627 = vpack.c.bf16 %v1595, %v1593
        %v1628 = vld [vmem:[%s5] sm:$0xff]
        %v1630 = vunpack.c.l.b16 %v1628
        %v1631 = vunpack.c.h.b16 %v1628
        %v1632 = vpack.c.b16 %v1630, %v1630
        %v1633 = vpack.c.b16 %v1631, %v1631
        %1636 = vmatprep.subr.bf16.mxu0 %v1611
        %1637 = vmatpush1.bf16.msra.mxu0 %v1610
        %1638 = vmatprep.subr.bf16.mxu0 %v1609
        %1639 = vmatpush1.bf16.msra.mxu0 %v1608
        %1640 = vmatprep.subr.bf16.mxu0 %v1607
        %1641 = vmatpush1.bf16.msra.mxu0 %v1606
        %1642 = vmatprep.subr.bf16.mxu0 %v1605
        %1643 = vmatpush1.bf16.msra.mxu0 %v1604
        %1644 = vmatprep.subr.bf16.mxu0 %v1603
        %1645 = vmatpush1.bf16.msra.mxu0 %v1602
        %1646 = vmatprep.subr.bf16.mxu0 %v1601
        %1647 = vmatpush1.bf16.msra.mxu0 %v1600
        %1648 = vmatprep.subr.bf16.mxu0 %v1599
        %1649 = vmatpush1.bf16.msra.mxu0 %v1598
        %1650 = vmatprep.subr.bf16.mxu0 %v1597
        %1651 = vmatpush1.bf16.msra.mxu0 %v1596
        %1652 = vmatprep.subr.bf16.mxu0 %v1627
        %1653 = vmatpush2.bf16.msra.mxu0 %v1626
        %1654 = vmatprep.subr.bf16.mxu0 %v1625
        %1655 = vmatpush2.bf16.msra.mxu0 %v1624
        %1656 = vmatprep.subr.bf16.mxu0 %v1623
        %1657 = vmatpush2.bf16.msra.mxu0 %v1622
        %1658 = vmatprep.subr.bf16.mxu0 %v1621
        %1659 = vmatpush2.bf16.msra.mxu0 %v1620
        %1660 = vmatprep.subr.bf16.mxu0 %v1619
        %1661 = vmatpush2.bf16.msra.mxu0 %v1618
        %1662 = vmatprep.subr.bf16.mxu0 %v1617
        %1663 = vmatpush2.bf16.msra.mxu0 %v1616
        %1664 = vmatprep.subr.bf16.mxu0 %v1615
        %1665 = vmatpush2.bf16.msra.mxu0 %v1614
        %1666 = vmatprep.subr.bf16.mxu0 %v1613
        %1667 = vmatpush2.bf16.msra.mxu0 %v1612
        %1668 = vmatprep.mubr.bf16.mxu0 %v1633
        %1669 = vmatmul.mubr.bf16.gmra.mxu0 %v1632
        %v1670 = vpop.f32.mrf.mxu0
        %v1671 = vadd.f32 0.0, %v1670
        %v1672 = vpop.f32.mrf.mxu0
        %v1673 = vadd.f32 0.0, %v1672
        %v1674 = vpop.f32.mrf.mxu0
        %v1675 = vpop.f32.mrf.mxu0
        %1676 = vdwg.mxu0
        %s1677 = sld [smem:[#allocation2]]
        %v1678 = vstv %s1677
        %v1679 = vadd.f32 %v1671, %v1678
        %v1680 = vadd.f32 %v1673, %v1678
        %v1683 = vcombine.low %v1679, %v1680
        %v1685 = vunpack.c.l.s4 1966171168
        %v1686 = vunpack.c.0.s8 %v1685
        %v1687 = vlaneseq
        %v1688 = vshrl.u32 %v1687, 7
        %v1689 = vsub.s32 %v1686, %v1688
        %v1690 = vrot.slane %v1683, %v1689
        %v1692 = vunpack.c.l.s4 1966171168
        %v1693 = vunpack.c.0.s8 %v1692
        %v1694 = vlaneseq
        %v1695 = vshrl.u32 %v1694, 7
        %v1696 = vsub.s32 %v1693, %v1695
        %v1697 = vrot.slane %v1690, %v1696
        %v1699 = vlaneseq
        %vm1700 = vcmp.ge.s32.totalorder %v1699, 0
        %vm1701 = vcmp.lt.s32.totalorder %v1699, 256
        %vm1702 = vmand %vm1700, %vm1701
        %1703 = vst.msk [vmem:[%s303] sm:$0x3] %vm1702, %v1697
        %s1704 = sand.u32 %s182, 1
        %s1705 = scalar_lea.sflag [#allocation5], %s1704
        %s1706 = sand.u32 %s182, 1
        %s1707 = smul.addr %s1706, 2
        %s1708 = scalar_lea.vmem [#allocation4], %s1707
        // Predicated region
        $region72: #{tpu_custom_call.1} parent=66 // pred_check
          %p1709 = pneg %p192
        $region73: #{tpu_custom_call.1} parent=66 // pred_check_branch
          %1711 = sbr.rel (%p1709) target = $region75
        $region74: #{tpu_custom_call.1} parent=66 // pred_region
          %s1712 = smul.u32 2, %s22
          %s1714 = ssub.s32 32, 32
          %1715 = vsyncadd %s1705, %s1714
          %s1716 = smul.addr %s1712, 16
          %s1717 = scalar_lea.hbm %s7, %s1716
          %s1719 = sshll.u32 %s1708, 4
          %s1720 = int_to_ptr.vmem [resolvable:$true] %s1719
          %1722 = dma.vmem_to_hbm [thread:$0]  %s1720, 32, %s1717, %s1705
        $region75: #{tpu_custom_call.1} parent=66 // pred_fallthru
          _
      $region67: #{tpu_custom_call.1} parent=5 // pred_fallthru
        _
      %p1723 = scmp.le.s32.totalorder 2, %s17
      // Predicated region
      $region76: #{tpu_custom_call.1} parent=5 // pred_check
        %p1724 = pneg %p1723
      $region77: #{tpu_custom_call.1} parent=5 // pred_check_branch
        %1726 = sbr.rel (%p1724) target = $region79
      $region78: #{tpu_custom_call.1} parent=5 // pred_region
        %s1727 = ssub.s32 %s17, 2
        // Predicated region
        $region80: #{tpu_custom_call.1} parent=78 // pred_check
          %p1728 = pneg %p198
        $region81: #{tpu_custom_call.1} parent=78 // pred_check_branch
          %1730 = sbr.rel (%p1728) target = $region83
        $region82: #{tpu_custom_call.1} parent=78 // pred_region
          %s1731 = sand.u32 %s183, 1
          %s1732 = scalar_lea.sflag [#allocation5], %s1731
          %s1733 = sand.u32 %s183, 1
          %s1734 = smul.addr %s1733, 2
          %s1735 = scalar_lea.vmem [#allocation4], %s1734
          %1736 = dma.done %s1732, 32
        $region83: #{tpu_custom_call.1} parent=78 // pred_fallthru
          _
      $region79: #{tpu_custom_call.1} parent=5 // pred_fallthru
        _
    $region6: #{tpu_custom_call.1} parent=1 // loop_footer
      %s21 = sadd.s32 1, %s17
    $region7: #{tpu_custom_call.1} parent=1 // loop_footer_branch
      %16 = sbr.rel target = $region3
    $region8: #{tpu_custom_call.1} parent=1 // loop_exit
      _
    %1737 = vsyncpa [#allocation5], 1
    %s1738 = scalar_lea.sflag [#allocation5], 1
    %1739 = vsyncpa %s1738, 1

</llo_original>
